<compile_context>
chip_gen: v7x
topology: tpu7x:2x2x1
jax: 0.10.0
libtpu: 0.0.40
codegen_flags: <defaults>
</compile_context>

<pallas_src>
import jax
import jax.numpy as jnp
from jax.experimental import pallas as pl
from jax.experimental.pallas import tpu as pltpu


def _round_up(x, m):
    return ((x + m - 1) // m) * m


def _autoencoder_kernel(x_ref, w1_ref, b1_ref, w2_ref, b2_ref, o_ref):
    # Encoder: Linear(input -> latent) + ReLU.  bf16 MXU operands, f32 accum.
    h = jnp.dot(x_ref[...], w1_ref[...], preferred_element_type=jnp.float32)
    h = jnp.maximum(h + b1_ref[...], 0.0)                 # f32 bias + ReLU
    # Decoder: Linear(latent -> input) + Sigmoid.
    y = jnp.dot(h.astype(w2_ref.dtype), w2_ref[...],
                preferred_element_type=jnp.float32)
    y = y + b2_ref[...]
    # Numerically-split sigmoid: z = exp(-|y|) in (0, 1], so no inf/NaN for
    # extreme pre-activations.  exp -> EUP, divide -> approx vrcp (EUP slot);
    # the extra select/mul land on otherwise-idle VALU slots.
    z = jnp.exp(-jnp.abs(y))
    inv = pl.reciprocal(1.0 + z, approx=True)
    o_ref[...] = jnp.where(y >= 0.0, inv, z * inv).astype(o_ref.dtype)


def autoencoder_forward(x, w1, b1, w2, b2, *, bm=512):
    """Autoencoder forward pass.

    x : (B, input_size)
    w1: (input_size, latent_size)   -- bfloat16 recommended
    b1: (latent_size,)
    w2: (latent_size, input_size)   -- bfloat16 recommended
    b2: (input_size,)
    Returns (B, input_size) float32.  Weights are stored (in, out) so the
    kernel computes y = x @ W + b  (== PyTorch's x @ W_t.T + b).
    """
    B, input_size = x.shape
    latent_size = w1.shape[1]
    assert w1.shape == (input_size, latent_size)
    assert w2.shape == (latent_size, input_size)

    compute_dtype = w1.dtype
    x = x.astype(compute_dtype)        # bf16 x: halves x DMA bytes + VMEM tile
    xbytes = x.dtype.itemsize
    wbytes = w1.dtype.itemsize

    # Lane-align feature dims (multiple of 128): zero padding is exact
    # (padded input features hit zero W1 rows; padded latent units get
    #  b1=0 -> relu(0)=0 -> zero W2 rows; padded output cols sliced off).
    in_pad = _round_up(input_size, 128)
    lat_pad = _round_up(latent_size, 128)
    if in_pad != input_size or lat_pad != latent_size:
        x = jnp.pad(x, ((0, 0), (0, in_pad - input_size)))
        w1 = jnp.pad(w1, ((0, in_pad - input_size), (0, lat_pad - latent_size)))
        b1 = jnp.pad(b1, ((0, lat_pad - latent_size),))
        w2 = jnp.pad(w2, ((0, lat_pad - latent_size), (0, in_pad - input_size)))
        b2 = jnp.pad(b2, ((0, in_pad - input_size),))

    b1_2d = b1.reshape(1, lat_pad).astype(jnp.float32)
    b2_2d = b2.reshape(1, in_pad).astype(jnp.float32)

    # Batch tile: target ~512 rows (amortizes ~0.35us/step grid overhead),
    # never below 8, and keep >=2 "parallel" grid steps when the batch allows
    # so both v7x TensorCores are busy.  No batch padding: grid is cdiv and
    # Pallas masks the ragged tail block.
    bm = max(8, min(_round_up(bm, 8), _round_up(B, 8)))
    if B >= 16:
        bm = min(bm, _round_up(pl.cdiv(B, 2), 8))
    grid = (pl.cdiv(B, bm),)

    # VMEM budget: double-buffered x (bf16) / out (f32) tiles, single-buffered
    # resident weights + biases, plus f32 live intermediates; 1.5x headroom,
    # floored at 16 MiB and capped by the chip's physical VMEM.
    vmem_bytes = (
        2 * bm * in_pad * xbytes                                # x tiles
        + 2 * bm * in_pad * 4                                   # out tiles
        + 2 * in_pad * lat_pad * wbytes                         # W1 + W2 (single buffer)
        + (in_pad + lat_pad) * 4                                # biases
        + bm * (lat_pad + in_pad) * 4                           # h / y live values
    )
    try:
        vmem_cap = pltpu.get_tpu_info().vmem_capacity_bytes
    except Exception:
        vmem_cap = 64 * 2**20                                   # v7x per-core (smallest)
    vmem_limit = int(min(max(int(1.5 * vmem_bytes), 16 * 2**20),
                         vmem_cap - 8 * 2**20))

    cost = pl.CostEstimate(
        flops=4 * B * in_pad * lat_pad,                         # two matmuls
        transcendentals=B * in_pad,                             # exp in sigmoid
        bytes_accessed=(
            B * in_pad * (xbytes + 4)                           # read x, write out
            + 2 * in_pad * lat_pad * wbytes                     # W1 + W2
            + (in_pad + lat_pad) * 4                            # biases
        ),
    )

    out = pl.pallas_call(
        _autoencoder_kernel,
        out_shape=jax.ShapeDtypeStruct((B, in_pad), jnp.float32),
        grid_spec=pltpu.PrefetchScalarGridSpec(
            num_scalar_prefetch=0,
            grid=grid,
            in_specs=[
                pl.BlockSpec((bm, in_pad), lambda i: (i, 0)),              # x tile
                pl.BlockSpec(memory_space=pltpu.MemorySpace.VMEM),         # W1 (resident, 1 buffer)
                pl.BlockSpec(memory_space=pltpu.MemorySpace.VMEM),         # b1
                pl.BlockSpec(memory_space=pltpu.MemorySpace.VMEM),         # W2 (resident, 1 buffer)
                pl.BlockSpec(memory_space=pltpu.MemorySpace.VMEM),         # b2
            ],
            out_specs=pl.BlockSpec((bm, in_pad), lambda i: (i, 0)),
        ),
        compiler_params=pltpu.CompilerParams(
            dimension_semantics=("parallel",),
            vmem_limit_bytes=vmem_limit,
        ),
        cost_estimate=cost,
    )(x, w1, b1_2d, w2, b2_2d)

    return out if in_pad == input_size else out[:, :input_size]


def init_params(key, input_size, latent_size):
    """Deterministic init mirroring nn.Linear default (uniform +/- 1/sqrt(fan_in)).

    Weights are stored transposed vs. PyTorch ((in, out)) and in bfloat16."""
    k1, k2, k3, k4 = jax.random.split(key, 4)
    bound1 = 1.0 / jnp.sqrt(input_size)
    bound2 = 1.0 / jnp.sqrt(latent_size)
    w1 = jax.random.uniform(k1, (input_size, latent_size), jnp.float32,
                            -bound1, bound1).astype(jnp.bfloat16)
    b1 = jax.random.uniform(k2, (latent_size,), jnp.float32, -bound1, bound1)
    w2 = jax.random.uniform(k3, (latent_size, input_size), jnp.float32,
                            -bound2, bound2).astype(jnp.bfloat16)
    b2 = jax.random.uniform(k4, (input_size,), jnp.float32, -bound2, bound2)
    return w1, b1, w2, b2


def reference_forward(x, w1, b1, w2, b2):
    """Pure-JAX reference mirroring the kernel's bf16-operand / f32-accum math."""
    w1f = w1.astype(jnp.float32)
    w2f = w2.astype(jnp.float32)
    xb = x.astype(jnp.bfloat16).astype(jnp.float32)
    h = jnp.maximum(xb @ w1f + b1, 0.0)
    hb = h.astype(jnp.bfloat16).astype(jnp.float32)
    return jax.nn.sigmoid(hb @ w2f + b2)


if __name__ == "__main__":
    # Flattened-image style input; batch=512 with the adaptive tile gives a
    # 2-step "parallel" grid (keeps both v7x TensorCores busy).
    batch, input_size, latent_size = 512, 256, 128

    key = jax.random.PRNGKey(0)
    kx, kp = jax.random.split(key)
    x = jax.random.uniform(kx, (batch, input_size), jnp.float32)
    w1, b1, w2, b2 = init_params(kp, input_size, latent_size)

    out = autoencoder_forward(x, w1, b1, w2, b2)
    out = jax.block_until_ready(out)
    ref = reference_forward(x, w1, b1, w2, b2)
    assert out.shape == (batch, input_size)
    # bf16 weights/x + approx reciprocal => relaxed tolerance vs f32 reference.
    assert jnp.allclose(out, ref, atol=1e-2, rtol=1e-2), float(jnp.max(jnp.abs(out - ref)))

    # Ragged batch (no padding copy; Pallas masks the tail block).
    xr = x[:200]
    out_r = jax.block_until_ready(autoencoder_forward(xr, w1, b1, w2, b2))
    ref_r = reference_forward(xr, w1, b1, w2, b2)
    assert out_r.shape == (200, input_size)
    assert jnp.allclose(out_r, ref_r, atol=1e-2, rtol=1e-2), float(jnp.max(jnp.abs(out_r - ref_r)))

    print("KERNEL_OK")
</pallas_src>

<mosaic_0001>
module attributes {stable_mosaic.version = 11 : i64} {
  func.func @_autoencoder_kernel(%arg0: i32, %arg1: memref<256x256xbf16, #tpu.memory_space<vmem>>, %arg2: memref<256x128xbf16, #tpu.memory_space<vmem>>, %arg3: memref<1x128xf32, #tpu.memory_space<vmem>>, %arg4: memref<128x256xbf16, #tpu.memory_space<vmem>>, %arg5: memref<1x256xf32, #tpu.memory_space<vmem>>, %arg6: memref<256x256xf32, #tpu.memory_space<vmem>>) attributes {dimension_semantics = [#tpu.dimension_semantics<parallel>], iteration_bounds = array<i64: 2>, scalar_prefetch = 0 : i64, scratch_operands = 0 : i64, tpu.core_type = #tpu.core_type<tc>, window_params = [{transform_indices = @transform_0, window_bounds = array<i64: 256, 256>}, {pipeline_mode = #tpu.pipeline_mode<synchronous>, transform_indices = @transform_1, window_bounds = array<i64: 256, 128>}, {pipeline_mode = #tpu.pipeline_mode<synchronous>, transform_indices = @transform_2, window_bounds = array<i64: 1, 128>}, {pipeline_mode = #tpu.pipeline_mode<synchronous>, transform_indices = @transform_3, window_bounds = array<i64: 128, 256>}, {pipeline_mode = #tpu.pipeline_mode<synchronous>, transform_indices = @transform_4, window_bounds = array<i64: 1, 256>}, {transform_indices = @transform_5, window_bounds = array<i64: 256, 256>}]} {
    %c0 = arith.constant 0 : index
    %c0_0 = arith.constant 0 : index
    %0 = vector.load %arg1[%c0, %c0_0] : memref<256x256xbf16, #tpu.memory_space<vmem>>, vector<256x256xbf16>
    %c0_1 = arith.constant 0 : index
    %c0_2 = arith.constant 0 : index
    %1 = vector.load %arg2[%c0_1, %c0_2] : memref<256x128xbf16, #tpu.memory_space<vmem>>, vector<256x128xbf16>
    %cst = arith.constant dense<0.000000e+00> : vector<256x128xf32>
    %2 = tpu.matmul %0, %1, %cst {dimension_numbers = #tpu.dot_dimension_numbers<[1], [0], [0], [1], [0, 0, 1, 1], [], []>} : vector<256x256xbf16>, vector<256x128xbf16>, vector<256x128xf32> -> vector<256x128xf32>
    %c0_3 = arith.constant 0 : index
    %c0_4 = arith.constant 0 : index
    %3 = vector.load %arg3[%c0_3, %c0_4] : memref<1x128xf32, #tpu.memory_space<vmem>>, vector<1x128xf32>
    %4 = vector.broadcast %3 : vector<1x128xf32> to vector<256x128xf32>
    %5 = arith.addf %2, %4 : vector<256x128xf32>
    %cst_5 = arith.constant 0.000000e+00 : f32
    %6 = vector.broadcast %cst_5 : f32 to vector<256x128xf32>
    %7 = arith.maximumf %5, %6 : vector<256x128xf32>
    %8 = arith.truncf %7 : vector<256x128xf32> to vector<256x128xbf16>
    %c0_6 = arith.constant 0 : index
    %c0_7 = arith.constant 0 : index
    %9 = vector.load %arg4[%c0_6, %c0_7] : memref<128x256xbf16, #tpu.memory_space<vmem>>, vector<128x256xbf16>
    %cst_8 = arith.constant dense<0.000000e+00> : vector<256x256xf32>
    %10 = tpu.matmul %8, %9, %cst_8 {dimension_numbers = #tpu.dot_dimension_numbers<[1], [0], [0], [1], [0, 0, 1, 1], [], []>} : vector<256x128xbf16>, vector<128x256xbf16>, vector<256x256xf32> -> vector<256x256xf32>
    %c0_9 = arith.constant 0 : index
    %c0_10 = arith.constant 0 : index
    %11 = vector.load %arg5[%c0_9, %c0_10] : memref<1x256xf32, #tpu.memory_space<vmem>>, vector<1x256xf32>
    %12 = vector.broadcast %11 : vector<1x256xf32> to vector<256x256xf32>
    %13 = arith.addf %10, %12 : vector<256x256xf32>
    %14 = math.absf %13 : vector<256x256xf32>
    %cst_11 = arith.constant 0.000000e+00 : f32
    %15 = vector.broadcast %cst_11 : f32 to vector<256x256xf32>
    %16 = arith.subf %15, %14 : vector<256x256xf32>
    %17 = math.exp %16 : vector<256x256xf32>
    %cst_12 = arith.constant 1.000000e+00 : f32
    %18 = vector.broadcast %cst_12 : f32 to vector<256x256xf32>
    %19 = arith.addf %18, %17 : vector<256x256xf32>
    %20 = tpu.reciprocal %19 {approx = true} : vector<256x256xf32> -> vector<256x256xf32>
    %cst_13 = arith.constant 0.000000e+00 : f32
    %21 = vector.broadcast %cst_13 : f32 to vector<256x256xf32>
    %22 = arith.cmpf oge, %13, %21 : vector<256x256xf32>
    %23 = arith.mulf %17, %20 : vector<256x256xf32>
    %24 = arith.select %22, %20, %23 : vector<256x256xi1>, vector<256x256xf32>
    %c0_14 = arith.constant 0 : index
    %c0_15 = arith.constant 0 : index
    %25 = vector.load %arg6[%c0_14, %c0_15] : memref<256x256xf32, #tpu.memory_space<vmem>>, vector<256x256xf32>
    tpu.vector_store %arg6[%c0_14, %c0_15], %24 {strides = array<i32>} : memref<256x256xf32, #tpu.memory_space<vmem>>, vector<256x256xf32>,
    return
  }
  func.func @transform_0(%arg0: i32) -> (i32, i32) {
    %c0_i32 = arith.constant 0 : i32
    %c0_i32_0 = arith.constant 0 : i32
    return %arg0, %c0_i32 : i32, i32
  }
  func.func @transform_1(%arg0: i32) -> (i32, i32) {
    %c0_i32 = arith.constant 0 : i32
    %c0_i32_0 = arith.constant 0 : i32
    %c0_i32_1 = arith.constant 0 : i32
    return %c0_i32, %c0_i32_0 : i32, i32
  }
  func.func @transform_2(%arg0: i32) -> (i32, i32) {
    %c0_i32 = arith.constant 0 : i32
    %c0_i32_0 = arith.constant 0 : i32
    %c0_i32_1 = arith.constant 0 : i32
    return %c0_i32, %c0_i32_0 : i32, i32
  }
  func.func @transform_3(%arg0: i32) -> (i32, i32) {
    %c0_i32 = arith.constant 0 : i32
    %c0_i32_0 = arith.constant 0 : i32
    %c0_i32_1 = arith.constant 0 : i32
    return %c0_i32, %c0_i32_0 : i32, i32
  }
  func.func @transform_4(%arg0: i32) -> (i32, i32) {
    %c0_i32 = arith.constant 0 : i32
    %c0_i32_0 = arith.constant 0 : i32
    %c0_i32_1 = arith.constant 0 : i32
    return %c0_i32, %c0_i32_0 : i32, i32
  }
  func.func @transform_5(%arg0: i32) -> (i32, i32) {
    %c0_i32 = arith.constant 0 : i32
    %c0_i32_0 = arith.constant 0 : i32
    return %arg0, %c0_i32 : i32, i32
  }
}

</mosaic_0001>

<llo_original>
// kernel: tpu_custom_call.1
$region0: #{tpu_custom_call.1}
  #allocation0 [shape = 'u32[]', space=smem, size = 0x4, offset = 0x4, fixed_abs, tag = 'smem constant byte address 0x4 - core index']
  #allocation1 [shape = 'u32[144,128]{1,0:T(1,128)}', space=vmem, size = 0x12000, scoped, tag = 'internal scratch']
  %s0 = inlined_call_operand.hbm [shape: bf16[512,256], index: 0, kind: input, shape index: {}]
  %s1 = inlined_call_operand.hbm [shape: bf16[256,128], index: 1, kind: input, shape index: {}]
  %s2 = inlined_call_operand.vmem [shape: f32[1,128], index: 2, kind: input, shape index: {}]
  %s3 = inlined_call_operand.hbm [shape: bf16[128,256], index: 3, kind: input, shape index: {}]
  %s4 = inlined_call_operand.vmem [shape: f32[1,256], index: 4, kind: input, shape index: {}]
  %s5 = inlined_call_operand.hbm [shape: f32[512,256], index: 5, kind: output, shape index: {}]
  %s6 = sld [smem:[#allocation0]]
  $region65: #{tpu_custom_call.1} parent=0
    _
  %s8 = ssub.s32 1, %s6
  %s9 = scalar_select 0, %s8, %s6
  $region1: #{tpu_custom_call.1} parent=0
    #allocation2 [shape = 'u8[262144]{0}', space=vmem, size = 0x40000, scoped, tag = 'input window, operand 0']
    #allocation3 [shape = 's32[2]{0}', space=sflag, size = 0x8, scoped, tag = 'scoped memory for tpu_custom_call.1']
    #allocation4 [shape = 's32[2]{0}', space=sflag, size = 0x8, scoped, tag = 'scoped memory for tpu_custom_call.1']
    #allocation5 [shape = 'u8[65536]{0}', space=vmem, size = 0x10000, scoped, tag = 'input window, operand 1, single buffered']
    #allocation6 [shape = 's32[1]{0}', space=sflag, size = 0x4, scoped, tag = 'scoped memory for tpu_custom_call.1']
    #allocation7 [shape = 'u8[65536]{0}', space=vmem, size = 0x10000, scoped, tag = 'input window, operand 3, single buffered']
    #allocation8 [shape = 'u8[524288]{0}', space=vmem, size = 0x80000, scoped, tag = 'output window, operand 0']
    %10 = vsyncpa [#allocation3], 0
    %s11 = scalar_lea.sflag [#allocation3], 1
    %12 = vsyncpa %s11, 0
    %13 = vsyncpa [#allocation6], 0
    %14 = vsyncpa [#allocation4], 0
    %s15 = scalar_lea.sflag [#allocation4], 1
    %16 = vsyncpa %s15, 0
    loop: start=0, step=1, limit=4
    $region2: #{tpu_custom_call.1} parent=1 // loop_pre_header
      _
    $region3: #{tpu_custom_call.1} parent=1 // loop_header
      %s18 = sphi 0, %s22
      %p19 = scmp.ge.s32.totalorder %s18, 4
      %s28 = sphi 0, %s30
      %s31 = sphi 0, %s28
      %s32 = sphi 0, %s31
      %s48 = sphi 0, %s32
      %s52 = sphi 0, %s52
      %s54 = sphi 0, %s52
      %s55 = sphi 0, %s54
      %s69 = sphi 0, %s55
      %s73 = sphi 0, %s73
      %s75 = sphi 0, %s73
      %s76 = sphi 0, %s75
      %s90 = sphi 0, %s76
      %s94 = sphi 0, %s94
      %s96 = sphi 0, %s94
      %s97 = sphi 0, %s96
      %s111 = sphi 0, %s97
      %s115 = sphi 0, %s115
      %s117 = sphi 0, %s115
      %s118 = sphi 0, %s117
      %s132 = sphi 0, %s118
      %s138 = sphi 0, %s140
      %s141 = sphi 0, %s138
      %s142 = sphi 0, %s141
      %s158 = sphi 0, %s142
    $region4: #{tpu_custom_call.1} parent=1 // loop_header_branch
      %21 = sbr.rel (%p19) target = $region8
    $region5: #{tpu_custom_call.1} parent=1 // loop_body
      %s23 = ssub.s32 %s18, 1
      %s24 = ssub.s32 %s18, 2
      %s25 = sadd.s32 %s18, 1
      %s26 = ssub.s32 %s18, %s25
      %p27 = scmp.eq.s32.totalorder %s26, 0
      %s29 = sadd.s32 %s28, 1
      %s30 = scalar_select %p27, %s28, %s29
      %p33 = pneg %p27
      %p34 = scmp.eq.s32.totalorder %s18, 1
      %p35 = por %p33, %p34
      %p36 = scmp.ne.s32.totalorder %s28, %s31
      %p37 = scmp.eq.s32.totalorder %s18, 0
      %p38 = por %p36, %p37
      %p39 = scmp.ne.s32.totalorder %s28, %s31
      %p40 = scmp.eq.s32.totalorder %s23, 1
      %p41 = por %p39, %p40
      %p42 = scmp.ne.s32.totalorder %s31, %s32
      %p43 = scmp.eq.s32.totalorder %s23, 0
      %p44 = por %p42, %p43
      %p45 = scmp.ne.s32.totalorder %s31, %s32
      %p46 = scmp.eq.s32.totalorder %s24, 1
      %p47 = por %p45, %p46
      %p49 = scmp.ne.s32.totalorder %s32, %s48
      %p50 = scmp.eq.s32.totalorder %s24, 0
      %p51 = por %p49, %p50
      %s53 = sadd.s32 %s52, 1
      %p56 = scmp.eq.s32.totalorder %s18, 1
      %p57 = scmp.ne.s32.totalorder %s52, %s54
      %p58 = scmp.eq.s32.totalorder %s18, 0
      %p59 = por %p57, %p58
      %p60 = scmp.ne.s32.totalorder %s52, %s54
      %p61 = scmp.eq.s32.totalorder %s23, 1
      %p62 = por %p60, %p61
      %p63 = scmp.ne.s32.totalorder %s54, %s55
      %p64 = scmp.eq.s32.totalorder %s23, 0
      %p65 = por %p63, %p64
      %p66 = scmp.ne.s32.totalorder %s54, %s55
      %p67 = scmp.eq.s32.totalorder %s24, 1
      %p68 = por %p66, %p67
      %p70 = scmp.ne.s32.totalorder %s55, %s69
      %p71 = scmp.eq.s32.totalorder %s24, 0
      %p72 = por %p70, %p71
      %s74 = sadd.s32 %s73, 1
      %p77 = scmp.eq.s32.totalorder %s18, 1
      %p78 = scmp.ne.s32.totalorder %s73, %s75
      %p79 = scmp.eq.s32.totalorder %s18, 0
      %p80 = por %p78, %p79
      %p81 = scmp.ne.s32.totalorder %s73, %s75
      %p82 = scmp.eq.s32.totalorder %s23, 1
      %p83 = por %p81, %p82
      %p84 = scmp.ne.s32.totalorder %s75, %s76
      %p85 = scmp.eq.s32.totalorder %s23, 0
      %p86 = por %p84, %p85
      %p87 = scmp.ne.s32.totalorder %s75, %s76
      %p88 = scmp.eq.s32.totalorder %s24, 1
      %p89 = por %p87, %p88
      %p91 = scmp.ne.s32.totalorder %s76, %s90
      %p92 = scmp.eq.s32.totalorder %s24, 0
      %p93 = por %p91, %p92
      %s95 = sadd.s32 %s94, 1
      %p98 = scmp.eq.s32.totalorder %s18, 1
      %p99 = scmp.ne.s32.totalorder %s94, %s96
      %p100 = scmp.eq.s32.totalorder %s18, 0
      %p101 = por %p99, %p100
      %p102 = scmp.ne.s32.totalorder %s94, %s96
      %p103 = scmp.eq.s32.totalorder %s23, 1
      %p104 = por %p102, %p103
      %p105 = scmp.ne.s32.totalorder %s96, %s97
      %p106 = scmp.eq.s32.totalorder %s23, 0
      %p107 = por %p105, %p106
      %p108 = scmp.ne.s32.totalorder %s96, %s97
      %p109 = scmp.eq.s32.totalorder %s24, 1
      %p110 = por %p108, %p109
      %p112 = scmp.ne.s32.totalorder %s97, %s111
      %p113 = scmp.eq.s32.totalorder %s24, 0
      %p114 = por %p112, %p113
      %s116 = sadd.s32 %s115, 1
      %p119 = scmp.eq.s32.totalorder %s18, 1
      %p120 = scmp.ne.s32.totalorder %s115, %s117
      %p121 = scmp.eq.s32.totalorder %s18, 0
      %p122 = por %p120, %p121
      %p123 = scmp.ne.s32.totalorder %s115, %s117
      %p124 = scmp.eq.s32.totalorder %s23, 1
      %p125 = por %p123, %p124
      %p126 = scmp.ne.s32.totalorder %s117, %s118
      %p127 = scmp.eq.s32.totalorder %s23, 0
      %p128 = por %p126, %p127
      %p129 = scmp.ne.s32.totalorder %s117, %s118
      %p130 = scmp.eq.s32.totalorder %s24, 1
      %p131 = por %p129, %p130
      %p133 = scmp.ne.s32.totalorder %s118, %s132
      %p134 = scmp.eq.s32.totalorder %s24, 0
      %p135 = por %p133, %p134
      %s136 = ssub.s32 %s18, %s25
      %p137 = scmp.eq.s32.totalorder %s136, 0
      %s139 = sadd.s32 %s138, 1
      %s140 = scalar_select %p137, %s138, %s139
      %p143 = pneg %p137
      %p144 = scmp.eq.s32.totalorder %s18, 1
      %p145 = por %p143, %p144
      %p146 = scmp.ne.s32.totalorder %s138, %s141
      %p147 = scmp.eq.s32.totalorder %s18, 0
      %p148 = por %p146, %p147
      %p149 = scmp.ne.s32.totalorder %s138, %s141
      %p150 = scmp.eq.s32.totalorder %s23, 1
      %p151 = por %p149, %p150
      %p152 = scmp.ne.s32.totalorder %s141, %s142
      %p153 = scmp.eq.s32.totalorder %s23, 0
      %p154 = por %p152, %p153
      %p155 = scmp.ne.s32.totalorder %s141, %s142
      %p156 = scmp.eq.s32.totalorder %s24, 1
      %p157 = por %p155, %p156
      %p159 = scmp.ne.s32.totalorder %s142, %s158
      %p160 = scmp.eq.s32.totalorder %s24, 0
      %p161 = por %p159, %p160
      %p162 = scmp.le.s32.totalorder 1, %s18
      %p163 = scmp.lt.s32.totalorder %s18, 3
      %p164 = pnand %p162, %p163
      %p165 = pneg %p164
      // Predicated region
      $region9: #{tpu_custom_call.1} parent=5 // pred_check
        _
      $region10: #{tpu_custom_call.1} parent=5 // pred_check_branch
        %167 = sbr.rel (%p164) target = $region12
      $region11: #{tpu_custom_call.1} parent=5 // pred_region
        %s168 = ssub.s32 %s18, 1
        // Predicated region
        $region13: #{tpu_custom_call.1} parent=11 // pred_check
          %p169 = pneg %p65
        $region14: #{tpu_custom_call.1} parent=11 // pred_check_branch
          %171 = sbr.rel (%p169) target = $region16
        $region15: #{tpu_custom_call.1} parent=11 // pred_region
          %s173 = ssub.s32 2048, 2048
          %174 = vsyncadd [#allocation6], %s173
          %s175 = sshll.u32 [#allocation5], 4
          %s176 = int_to_ptr.vmem [resolvable:$true] %s175
          %181 = dma.hbm_to_vmem [thread:$0]  %s1, 2048, %s176, [#allocation6], 64, 64, 4
        $region16: #{tpu_custom_call.1} parent=11 // pred_fallthru
          _
        // Predicated region
        $region17: #{tpu_custom_call.1} parent=11 // pred_check
          %p182 = pneg %p86
        $region18: #{tpu_custom_call.1} parent=11 // pred_check_branch
          %184 = sbr.rel (%p182) target = $region20
        $region19: #{tpu_custom_call.1} parent=11 // pred_region
          _
        $region20: #{tpu_custom_call.1} parent=11 // pred_fallthru
          _
        // Predicated region
        $region21: #{tpu_custom_call.1} parent=11 // pred_check
          %p185 = pneg %p107
        $region22: #{tpu_custom_call.1} parent=11 // pred_check_branch
          %187 = sbr.rel (%p185) target = $region24
        $region23: #{tpu_custom_call.1} parent=11 // pred_region
          %s189 = ssub.s32 2048, 2048
          %190 = vsyncadd [#allocation6], %s189
          %s191 = sshll.u32 [#allocation7], 4
          %s192 = int_to_ptr.vmem [resolvable:$true] %s191
          %197 = dma.hbm_to_vmem [thread:$0]  %s3, 2048, %s192, [#allocation6], 128, 128, 8
        $region24: #{tpu_custom_call.1} parent=11 // pred_fallthru
          _
        // Predicated region
        $region25: #{tpu_custom_call.1} parent=11 // pred_check
          %p198 = pneg %p128
        $region26: #{tpu_custom_call.1} parent=11 // pred_check_branch
          %200 = sbr.rel (%p198) target = $region28
        $region27: #{tpu_custom_call.1} parent=11 // pred_region
          _
        $region28: #{tpu_custom_call.1} parent=11 // pred_fallthru
          _
      $region12: #{tpu_custom_call.1} parent=5 // pred_fallthru
        _
      %p201 = scmp.lt.s32.totalorder %s18, 2
      // Predicated region
      $region29: #{tpu_custom_call.1} parent=5 // pred_check
        %p202 = pneg %p201
      $region30: #{tpu_custom_call.1} parent=5 // pred_check_branch
        %204 = sbr.rel (%p202) target = $region32
      $region31: #{tpu_custom_call.1} parent=5 // pred_region
        // Predicated region
        $region33: #{tpu_custom_call.1} parent=31 // pred_check
          %p205 = pneg %p38
        $region34: #{tpu_custom_call.1} parent=31 // pred_check_branch
          %207 = sbr.rel (%p205) target = $region36
        $region35: #{tpu_custom_call.1} parent=31 // pred_region
          %s208 = sand.u32 %s28, 1
          %s209 = scalar_lea.sflag [#allocation3], %s208
          %s210 = sand.u32 %s28, 1
          %s211 = smul.addr %s210, 256
          %s212 = scalar_lea.vmem [#allocation2], %s211
          %s213 = smul.u32 32, %s18
          %s215 = ssub.s32 4096, 4096
          %216 = vsyncadd %s209, %s215
          %s217 = smul.addr %s213, 2
          %s218 = smul.addr %s217, 64
          %s219 = scalar_lea.hbm %s0, %s218
          %s220 = sshll.u32 %s212, 4
          %s221 = int_to_ptr.vmem [resolvable:$true] %s220
          %226 = dma.hbm_to_vmem [thread:$0]  %s219, 4096, %s221, %s209, 128, 128, 8
        $region36: #{tpu_custom_call.1} parent=31 // pred_fallthru
          _
      $region32: #{tpu_custom_call.1} parent=5 // pred_fallthru
        _
      %p227 = scmp.le.s32.totalorder 1, %s18
      %p228 = scmp.lt.s32.totalorder %s18, 3
      %p229 = pnand %p227, %p228
      %p230 = pneg %p229
      // Predicated region
      $region37: #{tpu_custom_call.1} parent=5 // pred_check
        _
      $region38: #{tpu_custom_call.1} parent=5 // pred_check_branch
        %232 = sbr.rel (%p229) target = $region40
      $region39: #{tpu_custom_call.1} parent=5 // pred_region
        %s233 = ssub.s32 %s18, 1
        %s234 = sand.u32 %s31, 1
        %s235 = scalar_lea.sflag [#allocation3], %s234
        %s236 = sand.u32 %s31, 1
        %s237 = smul.addr %s236, 256
        %s238 = scalar_lea.vmem [#allocation2], %s237
        // Predicated region
        $region41: #{tpu_custom_call.1} parent=39 // pred_check
          %p239 = pneg %p44
        $region42: #{tpu_custom_call.1} parent=39 // pred_check_branch
          %241 = sbr.rel (%p239) target = $region44
        $region43: #{tpu_custom_call.1} parent=39 // pred_region
          %242 = dma.done %s235, 4096
        $region44: #{tpu_custom_call.1} parent=39 // pred_fallthru
          _
        // Predicated region
        $region45: #{tpu_custom_call.1} parent=39 // pred_check
          %p243 = pneg %p65
        $region46: #{tpu_custom_call.1} parent=39 // pred_check_branch
          %245 = sbr.rel (%p243) target = $region48
        $region47: #{tpu_custom_call.1} parent=39 // pred_region
          %246 = dma.done [#allocation6], 2048
        $region48: #{tpu_custom_call.1} parent=39 // pred_fallthru
          _
        // Predicated region
        $region49: #{tpu_custom_call.1} parent=39 // pred_check
          %p247 = pneg %p107
        $region50: #{tpu_custom_call.1} parent=39 // pred_check_branch
          %249 = sbr.rel (%p247) target = $region52
        $region51: #{tpu_custom_call.1} parent=39 // pred_region
          %250 = dma.done [#allocation6], 2048
        $region52: #{tpu_custom_call.1} parent=39 // pred_fallthru
          _
        %s251 = sand.u32 %s31, 1
        %s252 = scalar_lea.sflag [#allocation3], %s251
        %s253 = sand.u32 %s31, 1
        %s254 = smul.addr %s253, 256
        %s255 = scalar_lea.vmem [#allocation2], %s254
        %p256 = pneg %p44
        %p257 = pneg %p41
        %p258 = pneg %p65
        %p259 = pneg %p62
        %p260 = pneg %p86
        %p261 = pneg %p83
        %p262 = pneg %p107
        %p263 = pneg %p104
        %p264 = pneg %p128
        %p265 = pneg %p125
        %p266 = pneg %p154
        %p267 = pneg %p151
        %s268 = sand.u32 %s141, 1
        %s269 = scalar_lea.sflag [#allocation4], %s268
        %s270 = sand.u32 %s141, 1
        %s271 = smul.addr %s270, 512
        %s272 = scalar_lea.vmem [#allocation8], %s271
        %s273 = smul.u32 32, %s23
        %s274 = smul.u32 32, %s23
        %v276 = vld [vmem:[%s238] sm:$0xff]
        %v277 = vld [vmem:[%s238 + $0x8] sm:$0xff]
        %v278 = vld [vmem:[%s238 + $0x10] sm:$0xff]
        %v279 = vld [vmem:[%s238 + $0x18] sm:$0xff]
        %v280 = vld [vmem:[%s238 + $0x20] sm:$0xff]
        %v281 = vld [vmem:[%s238 + $0x28] sm:$0xff]
        %v282 = vld [vmem:[%s238 + $0x30] sm:$0xff]
        %v283 = vld [vmem:[%s238 + $0x38] sm:$0xff]
        %v284 = vld [vmem:[%s238 + $0x40] sm:$0xff]
        %v285 = vld [vmem:[%s238 + $0x48] sm:$0xff]
        %v286 = vld [vmem:[%s238 + $0x50] sm:$0xff]
        %v287 = vld [vmem:[%s238 + $0x58] sm:$0xff]
        %v288 = vld [vmem:[%s238 + $0x60] sm:$0xff]
        %v289 = vld [vmem:[%s238 + $0x68] sm:$0xff]
        %v290 = vld [vmem:[%s238 + $0x70] sm:$0xff]
        %v291 = vld [vmem:[%s238 + $0x78] sm:$0xff]
        %v292 = vld [vmem:[%s238 + $0x80] sm:$0xff]
        %v293 = vld [vmem:[%s238 + $0x88] sm:$0xff]
        %v294 = vld [vmem:[%s238 + $0x90] sm:$0xff]
        %v295 = vld [vmem:[%s238 + $0x98] sm:$0xff]
        %v296 = vld [vmem:[%s238 + $0xa0] sm:$0xff]
        %v297 = vld [vmem:[%s238 + $0xa8] sm:$0xff]
        %v298 = vld [vmem:[%s238 + $0xb0] sm:$0xff]
        %v299 = vld [vmem:[%s238 + $0xb8] sm:$0xff]
        %v300 = vld [vmem:[%s238 + $0xc0] sm:$0xff]
        %v301 = vld [vmem:[%s238 + $0xc8] sm:$0xff]
        %v302 = vld [vmem:[%s238 + $0xd0] sm:$0xff]
        %v303 = vld [vmem:[%s238 + $0xd8] sm:$0xff]
        %v304 = vld [vmem:[%s238 + $0xe0] sm:$0xff]
        %v305 = vld [vmem:[%s238 + $0xe8] sm:$0xff]
        %v306 = vld [vmem:[%s238 + $0xf0] sm:$0xff]
        %v307 = vld [vmem:[%s238 + $0xf8] sm:$0xff]
        %v308 = vld [vmem:[#allocation5] sm:$0xf]
        %v309 = vld [vmem:[#allocation5 + $0x4] sm:$0xf]
        %v310 = vld [vmem:[#allocation5 + $0x8] sm:$0xf]
        %v311 = vld [vmem:[#allocation5 + $0xc] sm:$0xf]
        %v312 = vld [vmem:[#allocation5 + $0x10] sm:$0xf]
        %v313 = vld [vmem:[#allocation5 + $0x14] sm:$0xf]
        %v314 = vld [vmem:[#allocation5 + $0x18] sm:$0xf]
        %v315 = vld [vmem:[#allocation5 + $0x1c] sm:$0xf]
        %v316 = vld [vmem:[#allocation5 + $0x20] sm:$0xf]
        %v317 = vld [vmem:[#allocation5 + $0x24] sm:$0xf]
        %v318 = vld [vmem:[#allocation5 + $0x28] sm:$0xf]
        %v319 = vld [vmem:[#allocation5 + $0x2c] sm:$0xf]
        %v320 = vld [vmem:[#allocation5 + $0x30] sm:$0xf]
        %v321 = vld [vmem:[#allocation5 + $0x34] sm:$0xf]
        %v322 = vld [vmem:[#allocation5 + $0x38] sm:$0xf]
        %v323 = vld [vmem:[#allocation5 + $0x3c] sm:$0xf]
        %v324 = vld [vmem:[#allocation5 + $0x40] sm:$0xf]
        %v325 = vld [vmem:[#allocation5 + $0x44] sm:$0xf]
        %v326 = vld [vmem:[#allocation5 + $0x48] sm:$0xf]
        %v327 = vld [vmem:[#allocation5 + $0x4c] sm:$0xf]
        %v328 = vld [vmem:[#allocation5 + $0x50] sm:$0xf]
        %v329 = vld [vmem:[#allocation5 + $0x54] sm:$0xf]
        %v330 = vld [vmem:[#allocation5 + $0x58] sm:$0xf]
        %v331 = vld [vmem:[#allocation5 + $0x5c] sm:$0xf]
        %v332 = vld [vmem:[#allocation5 + $0x60] sm:$0xf]
        %v333 = vld [vmem:[#allocation5 + $0x64] sm:$0xf]
        %v334 = vld [vmem:[#allocation5 + $0x68] sm:$0xf]
        %v335 = vld [vmem:[#allocation5 + $0x6c] sm:$0xf]
        %v336 = vld [vmem:[#allocation5 + $0x70] sm:$0xf]
        %v337 = vld [vmem:[#allocation5 + $0x74] sm:$0xf]
        %v338 = vld [vmem:[#allocation5 + $0x78] sm:$0xf]
        %v339 = vld [vmem:[#allocation5 + $0x7c] sm:$0xf]
        %v340 = vld [vmem:[%s2] sm:$0x1]
        %v342 = vlaneseq
        %v343 = vshrl.u32 %v342, 7
        %v344 = vsub.s32 0, %v343
        %v345 = vrot.slane %v340, %v344
        %v379 = vunpack.c.l.b16 %v276
        %v380 = vunpack.c.h.b16 %v276
        %v381 = vunpack.c.l.b16 %v277
        %v382 = vunpack.c.h.b16 %v277
        %v383 = vunpack.c.l.b16 %v278
        %v384 = vunpack.c.h.b16 %v278
        %v385 = vunpack.c.l.b16 %v279
        %v386 = vunpack.c.h.b16 %v279
        %v387 = vunpack.c.l.b16 %v280
        %v388 = vunpack.c.h.b16 %v280
        %v389 = vunpack.c.l.b16 %v281
        %v390 = vunpack.c.h.b16 %v281
        %v391 = vunpack.c.l.b16 %v282
        %v392 = vunpack.c.h.b16 %v282
        %v393 = vunpack.c.l.b16 %v283
        %v394 = vunpack.c.h.b16 %v283
        %v395 = vunpack.c.l.b16 %v284
        %v396 = vunpack.c.h.b16 %v284
        %v397 = vunpack.c.l.b16 %v285
        %v398 = vunpack.c.h.b16 %v285
        %v399 = vunpack.c.l.b16 %v286
        %v400 = vunpack.c.h.b16 %v286
        %v401 = vunpack.c.l.b16 %v287
        %v402 = vunpack.c.h.b16 %v287
        %v403 = vunpack.c.l.b16 %v288
        %v404 = vunpack.c.h.b16 %v288
        %v405 = vunpack.c.l.b16 %v289
        %v406 = vunpack.c.h.b16 %v289
        %v407 = vunpack.c.l.b16 %v290
        %v408 = vunpack.c.h.b16 %v290
        %v409 = vunpack.c.l.b16 %v291
        %v410 = vunpack.c.h.b16 %v291
        %v411 = vunpack.c.l.b16 %v292
        %v412 = vunpack.c.h.b16 %v292
        %v413 = vunpack.c.l.b16 %v293
        %v414 = vunpack.c.h.b16 %v293
        %v415 = vunpack.c.l.b16 %v294
        %v416 = vunpack.c.h.b16 %v294
        %v417 = vunpack.c.l.b16 %v295
        %v418 = vunpack.c.h.b16 %v295
        %v419 = vunpack.c.l.b16 %v296
        %v420 = vunpack.c.h.b16 %v296
        %v421 = vunpack.c.l.b16 %v297
        %v422 = vunpack.c.h.b16 %v297
        %v423 = vunpack.c.l.b16 %v298
        %v424 = vunpack.c.h.b16 %v298
        %v425 = vunpack.c.l.b16 %v299
        %v426 = vunpack.c.h.b16 %v299
        %v427 = vunpack.c.l.b16 %v300
        %v428 = vunpack.c.h.b16 %v300
        %v429 = vunpack.c.l.b16 %v301
        %v430 = vunpack.c.h.b16 %v301
        %v431 = vunpack.c.l.b16 %v302
        %v432 = vunpack.c.h.b16 %v302
        %v433 = vunpack.c.l.b16 %v303
        %v434 = vunpack.c.h.b16 %v303
        %v435 = vunpack.c.l.b16 %v304
        %v436 = vunpack.c.h.b16 %v304
        %v437 = vunpack.c.l.b16 %v305
        %v438 = vunpack.c.h.b16 %v305
        %v439 = vunpack.c.l.b16 %v306
        %v440 = vunpack.c.h.b16 %v306
        %v441 = vunpack.c.l.b16 %v307
        %v442 = vunpack.c.h.b16 %v307
        %v443 = vpack.c.b16 %v381, %v379
        %v444 = vpack.c.b16 %v382, %v380
        %v445 = vpack.c.b16 %v385, %v383
        %v446 = vpack.c.b16 %v386, %v384
        %v447 = vpack.c.b16 %v389, %v387
        %v448 = vpack.c.b16 %v390, %v388
        %v449 = vpack.c.b16 %v393, %v391
        %v450 = vpack.c.b16 %v394, %v392
        %v451 = vpack.c.b16 %v397, %v395
        %v452 = vpack.c.b16 %v398, %v396
        %v453 = vpack.c.b16 %v401, %v399
        %v454 = vpack.c.b16 %v402, %v400
        %v455 = vpack.c.b16 %v405, %v403
        %v456 = vpack.c.b16 %v406, %v404
        %v457 = vpack.c.b16 %v409, %v407
        %v458 = vpack.c.b16 %v410, %v408
        %v459 = vpack.c.b16 %v413, %v411
        %v460 = vpack.c.b16 %v414, %v412
        %v461 = vpack.c.b16 %v417, %v415
        %v462 = vpack.c.b16 %v418, %v416
        %v463 = vpack.c.b16 %v421, %v419
        %v464 = vpack.c.b16 %v422, %v420
        %v465 = vpack.c.b16 %v425, %v423
        %v466 = vpack.c.b16 %v426, %v424
        %v467 = vpack.c.b16 %v429, %v427
        %v468 = vpack.c.b16 %v430, %v428
        %v469 = vpack.c.b16 %v433, %v431
        %v470 = vpack.c.b16 %v434, %v432
        %v471 = vpack.c.b16 %v437, %v435
        %v472 = vpack.c.b16 %v438, %v436
        %v473 = vpack.c.b16 %v441, %v439
        %v474 = vpack.c.b16 %v442, %v440
        %v539 = vunpack.c.l.b16 %v308
        %v540 = vunpack.c.l.b16 %v309
        %v541 = vunpack.c.l.b16 %v310
        %v542 = vunpack.c.l.b16 %v311
        %v543 = vunpack.c.l.b16 %v312
        %v544 = vunpack.c.l.b16 %v313
        %v545 = vunpack.c.l.b16 %v314
        %v546 = vunpack.c.l.b16 %v315
        %v547 = vunpack.c.l.b16 %v316
        %v548 = vunpack.c.l.b16 %v317
        %v549 = vunpack.c.l.b16 %v318
        %v550 = vunpack.c.l.b16 %v319
        %v551 = vunpack.c.l.b16 %v320
        %v552 = vunpack.c.l.b16 %v321
        %v553 = vunpack.c.l.b16 %v322
        %v554 = vunpack.c.l.b16 %v323
        %v555 = vunpack.c.l.b16 %v324
        %v556 = vunpack.c.l.b16 %v325
        %v557 = vunpack.c.l.b16 %v326
        %v558 = vunpack.c.l.b16 %v327
        %v559 = vunpack.c.l.b16 %v328
        %v560 = vunpack.c.l.b16 %v329
        %v561 = vunpack.c.l.b16 %v330
        %v562 = vunpack.c.l.b16 %v331
        %v563 = vunpack.c.l.b16 %v332
        %v564 = vunpack.c.l.b16 %v333
        %v565 = vunpack.c.l.b16 %v334
        %v566 = vunpack.c.l.b16 %v335
        %v567 = vunpack.c.l.b16 %v336
        %v568 = vunpack.c.l.b16 %v337
        %v569 = vunpack.c.l.b16 %v338
        %v570 = vunpack.c.l.b16 %v339
        %v571 = vpack.c.b16 %v540, %v539
        %v572 = vpack.c.b16 %v542, %v541
        %v573 = vpack.c.b16 %v544, %v543
        %v574 = vpack.c.b16 %v546, %v545
        %v575 = vpack.c.b16 %v548, %v547
        %v576 = vpack.c.b16 %v550, %v549
        %v577 = vpack.c.b16 %v552, %v551
        %v578 = vpack.c.b16 %v554, %v553
        %v579 = vpack.c.b16 %v556, %v555
        %v580 = vpack.c.b16 %v558, %v557
        %v581 = vpack.c.b16 %v560, %v559
        %v582 = vpack.c.b16 %v562, %v561
        %v583 = vpack.c.b16 %v564, %v563
        %v584 = vpack.c.b16 %v566, %v565
        %v585 = vpack.c.b16 %v568, %v567
        %v586 = vpack.c.b16 %v570, %v569
        %603 = vmatprep.subr.bf16.mxu0 0
        %604 = vmatpush1.bf16.msra.mxu0 %v571
        %605 = vmatprep.subr.bf16.mxu0 0
        %606 = vmatpush1.bf16.msra.mxu0 %v572
        %607 = vmatprep.subr.bf16.mxu0 0
        %608 = vmatpush1.bf16.msra.mxu0 %v573
        %609 = vmatprep.subr.bf16.mxu0 0
        %610 = vmatpush1.bf16.msra.mxu0 %v574
        %611 = vmatprep.subr.bf16.mxu0 0
        %612 = vmatpush1.bf16.msra.mxu0 %v575
        %613 = vmatprep.subr.bf16.mxu0 0
        %614 = vmatpush1.bf16.msra.mxu0 %v576
        %615 = vmatprep.subr.bf16.mxu0 0
        %616 = vmatpush1.bf16.msra.mxu0 %v577
        %617 = vmatprep.subr.bf16.mxu0 0
        %618 = vmatpush1.bf16.msra.mxu0 %v578
        %619 = vmatprep.subr.bf16.mxu0 0
        %620 = vmatpush1.bf16.msra.mxu0 %v579
        %621 = vmatprep.subr.bf16.mxu0 0
        %622 = vmatpush1.bf16.msra.mxu0 %v580
        %623 = vmatprep.subr.bf16.mxu0 0
        %624 = vmatpush1.bf16.msra.mxu0 %v581
        %625 = vmatprep.subr.bf16.mxu0 0
        %626 = vmatpush1.bf16.msra.mxu0 %v582
        %627 = vmatprep.subr.bf16.mxu0 0
        %628 = vmatpush1.bf16.msra.mxu0 %v583
        %629 = vmatprep.subr.bf16.mxu0 0
        %630 = vmatpush1.bf16.msra.mxu0 %v584
        %631 = vmatprep.subr.bf16.mxu0 0
        %632 = vmatpush1.bf16.msra.mxu0 %v585
        %633 = vmatprep.subr.bf16.mxu0 0
        %634 = vmatpush1.bf16.msra.mxu0 %v586
        %635 = vmatprep.mubr.bf16.mxu0 %v444
        %636 = vmatmul.mubr.bf16.gmra.mrb[0].mxu0 %v443
        %v637 = vpop.f32.mrb[0].mxu0
        %v638 = vadd.f32 %v345, %v637
        %v639 = vpop.f32.mrb[0].mxu0
        %v640 = vpop.f32.mrb[0].mxu0
        %v641 = vadd.f32 %v345, %v640
        %v642 = vpop.f32.mrb[0].mxu0
        %643 = vmatprep.mubr.bf16.mxu0 %v446
        %644 = vmatmul.mubr.bf16.gmra.mrb[0].mxu0 %v445
        %v645 = vpop.f32.mrb[0].mxu0
        %v646 = vadd.f32 %v345, %v645
        %v647 = vpop.f32.mrb[0].mxu0
        %v648 = vpop.f32.mrb[0].mxu0
        %v649 = vadd.f32 %v345, %v648
        %v650 = vpop.f32.mrb[0].mxu0
        %651 = vmatprep.mubr.bf16.mxu0 %v448
        %652 = vmatmul.mubr.bf16.gmra.mrb[0].mxu0 %v447
        %v653 = vpop.f32.mrb[0].mxu0
        %v654 = vadd.f32 %v345, %v653
        %v655 = vpop.f32.mrb[0].mxu0
        %v656 = vpop.f32.mrb[0].mxu0
        %v657 = vadd.f32 %v345, %v656
        %v658 = vpop.f32.mrb[0].mxu0
        %659 = vmatprep.mubr.bf16.mxu0 %v450
        %660 = vmatmul.mubr.bf16.gmra.mrb[0].mxu0 %v449
        %v661 = vpop.f32.mrb[0].mxu0
        %v662 = vadd.f32 %v345, %v661
        %v663 = vpop.f32.mrb[0].mxu0
        %v664 = vpop.f32.mrb[0].mxu0
        %v665 = vadd.f32 %v345, %v664
        %v666 = vpop.f32.mrb[0].mxu0
        %667 = vmatprep.mubr.bf16.mxu0 %v452
        %668 = vmatmul.mubr.bf16.gmra.mrb[0].mxu0 %v451
        %v669 = vpop.f32.mrb[0].mxu0
        %v670 = vadd.f32 %v345, %v669
        %v671 = vpop.f32.mrb[0].mxu0
        %v672 = vpop.f32.mrb[0].mxu0
        %v673 = vadd.f32 %v345, %v672
        %v674 = vpop.f32.mrb[0].mxu0
        %675 = vmatprep.mubr.bf16.mxu0 %v454
        %676 = vmatmul.mubr.bf16.gmra.mrb[0].mxu0 %v453
        %v677 = vpop.f32.mrb[0].mxu0
        %v678 = vadd.f32 %v345, %v677
        %v679 = vpop.f32.mrb[0].mxu0
        %v680 = vpop.f32.mrb[0].mxu0
        %v681 = vadd.f32 %v345, %v680
        %v682 = vpop.f32.mrb[0].mxu0
        %683 = vmatprep.mubr.bf16.mxu0 %v456
        %684 = vmatmul.mubr.bf16.gmra.mrb[0].mxu0 %v455
        %v685 = vpop.f32.mrb[0].mxu0
        %v686 = vadd.f32 %v345, %v685
        %v687 = vpop.f32.mrb[0].mxu0
        %v688 = vpop.f32.mrb[0].mxu0
        %v689 = vadd.f32 %v345, %v688
        %v690 = vpop.f32.mrb[0].mxu0
        %691 = vmatprep.mubr.bf16.mxu0 %v458
        %692 = vmatmul.mubr.bf16.gmra.mrb[0].mxu0 %v457
        %v693 = vpop.f32.mrb[0].mxu0
        %v694 = vadd.f32 %v345, %v693
        %v695 = vpop.f32.mrb[0].mxu0
        %v696 = vpop.f32.mrb[0].mxu0
        %v697 = vadd.f32 %v345, %v696
        %v698 = vpop.f32.mrb[0].mxu0
        %699 = vmatprep.mubr.bf16.mxu0 %v460
        %700 = vmatmul.mubr.bf16.gmra.mrb[0].mxu0 %v459
        %v701 = vpop.f32.mrb[0].mxu0
        %v702 = vadd.f32 %v345, %v701
        %v703 = vpop.f32.mrb[0].mxu0
        %v704 = vpop.f32.mrb[0].mxu0
        %v705 = vadd.f32 %v345, %v704
        %v706 = vpop.f32.mrb[0].mxu0
        %707 = vmatprep.mubr.bf16.mxu0 %v462
        %708 = vmatmul.mubr.bf16.gmra.mrb[0].mxu0 %v461
        %v709 = vpop.f32.mrb[0].mxu0
        %v710 = vadd.f32 %v345, %v709
        %v711 = vpop.f32.mrb[0].mxu0
        %v712 = vpop.f32.mrb[0].mxu0
        %v713 = vadd.f32 %v345, %v712
        %v714 = vpop.f32.mrb[0].mxu0
        %715 = vmatprep.mubr.bf16.mxu0 %v464
        %716 = vmatmul.mubr.bf16.gmra.mrb[0].mxu0 %v463
        %v717 = vpop.f32.mrb[0].mxu0
        %v718 = vadd.f32 %v345, %v717
        %v719 = vpop.f32.mrb[0].mxu0
        %v720 = vpop.f32.mrb[0].mxu0
        %v721 = vadd.f32 %v345, %v720
        %v722 = vpop.f32.mrb[0].mxu0
        %723 = vmatprep.mubr.bf16.mxu0 %v466
        %724 = vmatmul.mubr.bf16.gmra.mrb[0].mxu0 %v465
        %v725 = vpop.f32.mrb[0].mxu0
        %v726 = vadd.f32 %v345, %v725
        %v727 = vpop.f32.mrb[0].mxu0
        %v728 = vpop.f32.mrb[0].mxu0
        %v729 = vadd.f32 %v345, %v728
        %v730 = vpop.f32.mrb[0].mxu0
        %731 = vmatprep.mubr.bf16.mxu0 %v468
        %732 = vmatmul.mubr.bf16.gmra.mrb[0].mxu0 %v467
        %v733 = vpop.f32.mrb[0].mxu0
        %v734 = vadd.f32 %v345, %v733
        %v735 = vpop.f32.mrb[0].mxu0
        %v736 = vpop.f32.mrb[0].mxu0
        %v737 = vadd.f32 %v345, %v736
        %v738 = vpop.f32.mrb[0].mxu0
        %739 = vmatprep.mubr.bf16.mxu0 %v470
        %740 = vmatmul.mubr.bf16.gmra.mrb[0].mxu0 %v469
        %v741 = vpop.f32.mrb[0].mxu0
        %v742 = vadd.f32 %v345, %v741
        %v743 = vpop.f32.mrb[0].mxu0
        %v744 = vpop.f32.mrb[0].mxu0
        %v745 = vadd.f32 %v345, %v744
        %v746 = vpop.f32.mrb[0].mxu0
        %747 = vmatprep.mubr.bf16.mxu0 %v472
        %748 = vmatmul.mubr.bf16.gmra.mrb[0].mxu0 %v471
        %v749 = vpop.f32.mrb[0].mxu0
        %v750 = vadd.f32 %v345, %v749
        %v751 = vpop.f32.mrb[0].mxu0
        %v752 = vpop.f32.mrb[0].mxu0
        %v753 = vadd.f32 %v345, %v752
        %v754 = vpop.f32.mrb[0].mxu0
        %755 = vmatprep.mubr.bf16.mxu0 %v474
        %756 = vmatmul.mubr.bf16.gmra.mrb[0].mxu0 %v473
        %v757 = vpop.f32.mrb[0].mxu0
        %v758 = vadd.f32 %v345, %v757
        %v759 = vpop.f32.mrb[0].mxu0
        %v760 = vpop.f32.mrb[0].mxu0
        %v761 = vadd.f32 %v345, %v760
        %v762 = vpop.f32.mrb[0].mxu0
        %763 = vdwg.mxu0
        %v764 = vmax.f32 %v638, 0.0
        %v765 = vmax.f32 %v641, 0.0
        %v766 = vmax.f32 %v646, 0.0
        %v767 = vmax.f32 %v649, 0.0
        %v768 = vmax.f32 %v654, 0.0
        %v769 = vmax.f32 %v657, 0.0
        %v770 = vmax.f32 %v662, 0.0
        %v771 = vmax.f32 %v665, 0.0
        %v772 = vmax.f32 %v670, 0.0
        %v773 = vmax.f32 %v673, 0.0
        %v774 = vmax.f32 %v678, 0.0
        %v775 = vmax.f32 %v681, 0.0
        %v776 = vmax.f32 %v686, 0.0
        %v777 = vmax.f32 %v689, 0.0
        %v778 = vmax.f32 %v694, 0.0
        %v779 = vmax.f32 %v697, 0.0
        %v780 = vmax.f32 %v702, 0.0
        %v781 = vmax.f32 %v705, 0.0
        %v782 = vmax.f32 %v710, 0.0
        %v783 = vmax.f32 %v713, 0.0
        %v784 = vmax.f32 %v718, 0.0
        %v785 = vmax.f32 %v721, 0.0
        %v786 = vmax.f32 %v726, 0.0
        %v787 = vmax.f32 %v729, 0.0
        %v788 = vmax.f32 %v734, 0.0
        %v789 = vmax.f32 %v737, 0.0
        %v790 = vmax.f32 %v742, 0.0
        %v791 = vmax.f32 %v745, 0.0
        %v792 = vmax.f32 %v750, 0.0
        %v793 = vmax.f32 %v753, 0.0
        %v794 = vmax.f32 %v758, 0.0
        %v795 = vmax.f32 %v761, 0.0
        %v796 = vpack.c.bf16 %v765, %v764
        %v797 = vpack.c.bf16 %v767, %v766
        %v798 = vpack.c.bf16 %v769, %v768
        %v799 = vpack.c.bf16 %v771, %v770
        %v800 = vpack.c.bf16 %v773, %v772
        %v801 = vpack.c.bf16 %v775, %v774
        %v802 = vpack.c.bf16 %v777, %v776
        %v803 = vpack.c.bf16 %v779, %v778
        %v804 = vpack.c.bf16 %v781, %v780
        %v805 = vpack.c.bf16 %v783, %v782
        %v806 = vpack.c.bf16 %v785, %v784
        %v807 = vpack.c.bf16 %v787, %v786
        %v808 = vpack.c.bf16 %v789, %v788
        %v809 = vpack.c.bf16 %v791, %v790
        %v810 = vpack.c.bf16 %v793, %v792
        %v811 = vpack.c.bf16 %v795, %v794
        %v812 = vld [vmem:[#allocation7] sm:$0xff]
        %v813 = vld [vmem:[#allocation7 + $0x8] sm:$0xff]
        %v814 = vld [vmem:[#allocation7 + $0x10] sm:$0xff]
        %v815 = vld [vmem:[#allocation7 + $0x18] sm:$0xff]
        %v816 = vld [vmem:[#allocation7 + $0x20] sm:$0xff]
        %v817 = vld [vmem:[#allocation7 + $0x28] sm:$0xff]
        %v818 = vld [vmem:[#allocation7 + $0x30] sm:$0xff]
        %v819 = vld [vmem:[#allocation7 + $0x38] sm:$0xff]
        %v820 = vld [vmem:[#allocation7 + $0x40] sm:$0xff]
        %v821 = vld [vmem:[#allocation7 + $0x48] sm:$0xff]
        %v822 = vld [vmem:[#allocation7 + $0x50] sm:$0xff]
        %v823 = vld [vmem:[#allocation7 + $0x58] sm:$0xff]
        %v824 = vld [vmem:[#allocation7 + $0x60] sm:$0xff]
        %v825 = vld [vmem:[#allocation7 + $0x68] sm:$0xff]
        %v826 = vld [vmem:[#allocation7 + $0x70] sm:$0xff]
        %v827 = vld [vmem:[#allocation7 + $0x78] sm:$0xff]
        %v828 = vld [vmem:[%s4] sm:$0x3]
        %v830 = vlaneseq
        %v831 = vshrl.u32 %v830, 7
        %v832 = vsub.s32 0, %v831
        %v833 = vrot.slane %v828, %v832
        %v834 = vlaneseq
        %v835 = vshrl.u32 %v834, 7
        %v836 = vsub.s32 1, %v835
        %v837 = vrot.slane %v828, %v836
        %v856 = vunpack.c.l.b16 %v812
        %v857 = vunpack.c.h.b16 %v812
        %v858 = vunpack.c.l.b16 %v813
        %v859 = vunpack.c.h.b16 %v813
        %v860 = vunpack.c.l.b16 %v814
        %v861 = vunpack.c.h.b16 %v814
        %v862 = vunpack.c.l.b16 %v815
        %v863 = vunpack.c.h.b16 %v815
        %v864 = vunpack.c.l.b16 %v816
        %v865 = vunpack.c.h.b16 %v816
        %v866 = vunpack.c.l.b16 %v817
        %v867 = vunpack.c.h.b16 %v817
        %v868 = vunpack.c.l.b16 %v818
        %v869 = vunpack.c.h.b16 %v818
        %v870 = vunpack.c.l.b16 %v819
        %v871 = vunpack.c.h.b16 %v819
        %v872 = vunpack.c.l.b16 %v820
        %v873 = vunpack.c.h.b16 %v820
        %v874 = vunpack.c.l.b16 %v821
        %v875 = vunpack.c.h.b16 %v821
        %v876 = vunpack.c.l.b16 %v822
        %v877 = vunpack.c.h.b16 %v822
        %v878 = vunpack.c.l.b16 %v823
        %v879 = vunpack.c.h.b16 %v823
        %v880 = vunpack.c.l.b16 %v824
        %v881 = vunpack.c.h.b16 %v824
        %v882 = vunpack.c.l.b16 %v825
        %v883 = vunpack.c.h.b16 %v825
        %v884 = vunpack.c.l.b16 %v826
        %v885 = vunpack.c.h.b16 %v826
        %v886 = vunpack.c.l.b16 %v827
        %v887 = vunpack.c.h.b16 %v827
        %v888 = vpack.c.b16 %v858, %v856
        %v889 = vpack.c.b16 %v859, %v857
        %v890 = vpack.c.b16 %v862, %v860
        %v891 = vpack.c.b16 %v863, %v861
        %v892 = vpack.c.b16 %v866, %v864
        %v893 = vpack.c.b16 %v867, %v865
        %v894 = vpack.c.b16 %v870, %v868
        %v895 = vpack.c.b16 %v871, %v869
        %v896 = vpack.c.b16 %v874, %v872
        %v897 = vpack.c.b16 %v875, %v873
        %v898 = vpack.c.b16 %v878, %v876
        %v899 = vpack.c.b16 %v879, %v877
        %v900 = vpack.c.b16 %v882, %v880
        %v901 = vpack.c.b16 %v883, %v881
        %v902 = vpack.c.b16 %v886, %v884
        %v903 = vpack.c.b16 %v887, %v885
        %920 = vmatprep.subr.bf16.mxu0 %v889
        %921 = vmatpush1.bf16.msra.mxu0 %v888
        %922 = vmatprep.subr.bf16.mxu0 %v891
        %923 = vmatpush1.bf16.msra.mxu0 %v890
        %924 = vmatprep.subr.bf16.mxu0 %v893
        %925 = vmatpush1.bf16.msra.mxu0 %v892
        %926 = vmatprep.subr.bf16.mxu0 %v895
        %927 = vmatpush1.bf16.msra.mxu0 %v894
        %928 = vmatprep.subr.bf16.mxu0 %v897
        %929 = vmatpush1.bf16.msra.mxu0 %v896
        %930 = vmatprep.subr.bf16.mxu0 %v899
        %931 = vmatpush1.bf16.msra.mxu0 %v898
        %932 = vmatprep.subr.bf16.mxu0 %v901
        %933 = vmatpush1.bf16.msra.mxu0 %v900
        %934 = vmatprep.subr.bf16.mxu0 %v903
        %935 = vmatpush1.bf16.msra.mxu0 %v902
        %936 = vmatprep.subr.bf16.mxu0 0
        %937 = vmatpush1.bf16.msra.mxu0 0
        %938 = vmatprep.subr.bf16.mxu0 0
        %939 = vmatpush1.bf16.msra.mxu0 0
        %940 = vmatprep.subr.bf16.mxu0 0
        %941 = vmatpush1.bf16.msra.mxu0 0
        %942 = vmatprep.subr.bf16.mxu0 0
        %943 = vmatpush1.bf16.msra.mxu0 0
        %944 = vmatprep.subr.bf16.mxu0 0
        %945 = vmatpush1.bf16.msra.mxu0 0
        %946 = vmatprep.subr.bf16.mxu0 0
        %947 = vmatpush1.bf16.msra.mxu0 0
        %948 = vmatprep.subr.bf16.mxu0 0
        %949 = vmatpush1.bf16.msra.mxu0 0
        %950 = vmatprep.subr.bf16.mxu0 0
        %951 = vmatpush1.bf16.msra.mxu0 0
        %952 = vmatprep.mubr.bf16.mxu0 0
        %953 = vmatmul.mubr.bf16.gmra.mrb[0].mxu0 %v796
        %v954 = vpop.f32.mrb[0].mxu0
        %v955 = vadd.f32 %v833, %v954
        %v956 = vpop.f32.mrb[0].mxu0
        %v957 = vadd.f32 %v837, %v956
        %v958 = vpop.f32.mrb[0].mxu0
        %v959 = vadd.f32 %v833, %v958
        %v960 = vpop.f32.mrb[0].mxu0
        %v961 = vadd.f32 %v837, %v960
        %962 = vmatprep.mubr.bf16.mxu0 0
        %963 = vmatmul.mubr.bf16.gmra.mrb[0].mxu0 %v797
        %v964 = vpop.f32.mrb[0].mxu0
        %v965 = vadd.f32 %v833, %v964
        %v966 = vpop.f32.mrb[0].mxu0
        %v967 = vadd.f32 %v837, %v966
        %v968 = vpop.f32.mrb[0].mxu0
        %v969 = vadd.f32 %v833, %v968
        %v970 = vpop.f32.mrb[0].mxu0
        %v971 = vadd.f32 %v837, %v970
        %972 = vmatprep.mubr.bf16.mxu0 0
        %973 = vmatmul.mubr.bf16.gmra.mrb[0].mxu0 %v798
        %v974 = vpop.f32.mrb[0].mxu0
        %v975 = vadd.f32 %v833, %v974
        %v976 = vpop.f32.mrb[0].mxu0
        %v977 = vadd.f32 %v837, %v976
        %v978 = vpop.f32.mrb[0].mxu0
        %v979 = vadd.f32 %v833, %v978
        %v980 = vpop.f32.mrb[0].mxu0
        %v981 = vadd.f32 %v837, %v980
        %982 = vmatprep.mubr.bf16.mxu0 0
        %983 = vmatmul.mubr.bf16.gmra.mrb[0].mxu0 %v799
        %v984 = vpop.f32.mrb[0].mxu0
        %v985 = vadd.f32 %v833, %v984
        %v986 = vpop.f32.mrb[0].mxu0
        %v987 = vadd.f32 %v837, %v986
        %v988 = vpop.f32.mrb[0].mxu0
        %v989 = vadd.f32 %v833, %v988
        %v990 = vpop.f32.mrb[0].mxu0
        %v991 = vadd.f32 %v837, %v990
        %992 = vmatprep.mubr.bf16.mxu0 0
        %993 = vmatmul.mubr.bf16.gmra.mrb[0].mxu0 %v800
        %v994 = vpop.f32.mrb[0].mxu0
        %v995 = vadd.f32 %v833, %v994
        %v996 = vpop.f32.mrb[0].mxu0
        %v997 = vadd.f32 %v837, %v996
        %v998 = vpop.f32.mrb[0].mxu0
        %v999 = vadd.f32 %v833, %v998
        %v1000 = vpop.f32.mrb[0].mxu0
        %v1001 = vadd.f32 %v837, %v1000
        %1002 = vmatprep.mubr.bf16.mxu0 0
        %1003 = vmatmul.mubr.bf16.gmra.mrb[0].mxu0 %v801
        %v1004 = vpop.f32.mrb[0].mxu0
        %v1005 = vadd.f32 %v833, %v1004
        %v1006 = vpop.f32.mrb[0].mxu0
        %v1007 = vadd.f32 %v837, %v1006
        %v1008 = vpop.f32.mrb[0].mxu0
        %v1009 = vadd.f32 %v833, %v1008
        %v1010 = vpop.f32.mrb[0].mxu0
        %v1011 = vadd.f32 %v837, %v1010
        %1012 = vmatprep.mubr.bf16.mxu0 0
        %1013 = vmatmul.mubr.bf16.gmra.mrb[0].mxu0 %v802
        %v1014 = vpop.f32.mrb[0].mxu0
        %v1015 = vadd.f32 %v833, %v1014
        %v1016 = vpop.f32.mrb[0].mxu0
        %v1017 = vadd.f32 %v837, %v1016
        %v1018 = vpop.f32.mrb[0].mxu0
        %v1019 = vadd.f32 %v833, %v1018
        %v1020 = vpop.f32.mrb[0].mxu0
        %v1021 = vadd.f32 %v837, %v1020
        %1022 = vmatprep.mubr.bf16.mxu0 0
        %1023 = vmatmul.mubr.bf16.gmra.mrb[0].mxu0 %v803
        %v1024 = vpop.f32.mrb[0].mxu0
        %v1025 = vadd.f32 %v833, %v1024
        %v1026 = vpop.f32.mrb[0].mxu0
        %v1027 = vadd.f32 %v837, %v1026
        %v1028 = vpop.f32.mrb[0].mxu0
        %v1029 = vadd.f32 %v833, %v1028
        %v1030 = vpop.f32.mrb[0].mxu0
        %v1031 = vadd.f32 %v837, %v1030
        %1032 = vmatprep.mubr.bf16.mxu0 0
        %1033 = vmatmul.mubr.bf16.gmra.mrb[0].mxu0 %v804
        %v1034 = vpop.f32.mrb[0].mxu0
        %v1035 = vadd.f32 %v833, %v1034
        %v1036 = vpop.f32.mrb[0].mxu0
        %v1037 = vadd.f32 %v837, %v1036
        %v1038 = vpop.f32.mrb[0].mxu0
        %v1039 = vadd.f32 %v833, %v1038
        %v1040 = vpop.f32.mrb[0].mxu0
        %v1041 = vadd.f32 %v837, %v1040
        %1042 = vmatprep.mubr.bf16.mxu0 0
        %1043 = vmatmul.mubr.bf16.gmra.mrb[0].mxu0 %v805
        %v1044 = vpop.f32.mrb[0].mxu0
        %v1045 = vadd.f32 %v833, %v1044
        %v1046 = vpop.f32.mrb[0].mxu0
        %v1047 = vadd.f32 %v837, %v1046
        %v1048 = vpop.f32.mrb[0].mxu0
        %v1049 = vadd.f32 %v833, %v1048
        %v1050 = vpop.f32.mrb[0].mxu0
        %v1051 = vadd.f32 %v837, %v1050
        %1052 = vmatprep.mubr.bf16.mxu0 0
        %1053 = vmatmul.mubr.bf16.gmra.mrb[0].mxu0 %v806
        %v1054 = vpop.f32.mrb[0].mxu0
        %v1055 = vadd.f32 %v833, %v1054
        %v1056 = vpop.f32.mrb[0].mxu0
        %v1057 = vadd.f32 %v837, %v1056
        %v1058 = vpop.f32.mrb[0].mxu0
        %v1059 = vadd.f32 %v833, %v1058
        %v1060 = vpop.f32.mrb[0].mxu0
        %v1061 = vadd.f32 %v837, %v1060
        %1062 = vmatprep.mubr.bf16.mxu0 0
        %1063 = vmatmul.mubr.bf16.gmra.mrb[0].mxu0 %v807
        %v1064 = vpop.f32.mrb[0].mxu0
        %v1065 = vadd.f32 %v833, %v1064
        %v1066 = vpop.f32.mrb[0].mxu0
        %v1067 = vadd.f32 %v837, %v1066
        %v1068 = vpop.f32.mrb[0].mxu0
        %v1069 = vadd.f32 %v833, %v1068
        %v1070 = vpop.f32.mrb[0].mxu0
        %v1071 = vadd.f32 %v837, %v1070
        %1072 = vmatprep.mubr.bf16.mxu0 0
        %1073 = vmatmul.mubr.bf16.gmra.mrb[0].mxu0 %v808
        %v1074 = vpop.f32.mrb[0].mxu0
        %v1075 = vadd.f32 %v833, %v1074
        %v1076 = vpop.f32.mrb[0].mxu0
        %v1077 = vadd.f32 %v837, %v1076
        %v1078 = vpop.f32.mrb[0].mxu0
        %v1079 = vadd.f32 %v833, %v1078
        %v1080 = vpop.f32.mrb[0].mxu0
        %v1081 = vadd.f32 %v837, %v1080
        %1082 = vmatprep.mubr.bf16.mxu0 0
        %1083 = vmatmul.mubr.bf16.gmra.mrb[0].mxu0 %v809
        %v1084 = vpop.f32.mrb[0].mxu0
        %v1085 = vadd.f32 %v833, %v1084
        %v1086 = vpop.f32.mrb[0].mxu0
        %v1087 = vadd.f32 %v837, %v1086
        %v1088 = vpop.f32.mrb[0].mxu0
        %v1089 = vadd.f32 %v833, %v1088
        %v1090 = vpop.f32.mrb[0].mxu0
        %v1091 = vadd.f32 %v837, %v1090
        %1092 = vmatprep.mubr.bf16.mxu0 0
        %1093 = vmatmul.mubr.bf16.gmra.mrb[0].mxu0 %v810
        %v1094 = vpop.f32.mrb[0].mxu0
        %v1095 = vadd.f32 %v833, %v1094
        %v1096 = vpop.f32.mrb[0].mxu0
        %v1097 = vadd.f32 %v837, %v1096
        %v1098 = vpop.f32.mrb[0].mxu0
        %v1099 = vadd.f32 %v833, %v1098
        %v1100 = vpop.f32.mrb[0].mxu0
        %v1101 = vadd.f32 %v837, %v1100
        %1102 = vmatprep.mubr.bf16.mxu0 0
        %1103 = vmatmul.mubr.bf16.gmra.mrb[0].mxu0 %v811
        %v1104 = vpop.f32.mrb[0].mxu0
        %v1105 = vadd.f32 %v833, %v1104
        %v1106 = vpop.f32.mrb[0].mxu0
        %v1107 = vadd.f32 %v837, %v1106
        %v1108 = vpop.f32.mrb[0].mxu0
        %v1109 = vadd.f32 %v833, %v1108
        %v1110 = vpop.f32.mrb[0].mxu0
        %v1111 = vadd.f32 %v837, %v1110
        %1112 = vdwg.mxu0
        %v1113 = vand.u32 2147483647, %v955
        %v1114 = vand.u32 2147483647, %v957
        %v1115 = vand.u32 2147483647, %v959
        %v1116 = vand.u32 2147483647, %v961
        %v1117 = vand.u32 2147483647, %v965
        %v1118 = vand.u32 2147483647, %v967
        %v1119 = vand.u32 2147483647, %v969
        %v1120 = vand.u32 2147483647, %v971
        %v1121 = vand.u32 2147483647, %v975
        %v1122 = vand.u32 2147483647, %v977
        %v1123 = vand.u32 2147483647, %v979
        %v1124 = vand.u32 2147483647, %v981
        %v1125 = vand.u32 2147483647, %v985
        %v1126 = vand.u32 2147483647, %v987
        %v1127 = vand.u32 2147483647, %v989
        %v1128 = vand.u32 2147483647, %v991
        %v1129 = vand.u32 2147483647, %v995
        %v1130 = vand.u32 2147483647, %v997
        %v1131 = vand.u32 2147483647, %v999
        %v1132 = vand.u32 2147483647, %v1001
        %v1133 = vand.u32 2147483647, %v1005
        %v1134 = vand.u32 2147483647, %v1007
        %v1135 = vand.u32 2147483647, %v1009
        %v1136 = vand.u32 2147483647, %v1011
        %v1137 = vand.u32 2147483647, %v1015
        %v1138 = vand.u32 2147483647, %v1017
        %v1139 = vand.u32 2147483647, %v1019
        %v1140 = vand.u32 2147483647, %v1021
        %v1141 = vand.u32 2147483647, %v1025
        %v1142 = vand.u32 2147483647, %v1027
        %v1143 = vand.u32 2147483647, %v1029
        %v1144 = vand.u32 2147483647, %v1031
        %v1145 = vand.u32 2147483647, %v1035
        %v1146 = vand.u32 2147483647, %v1037
        %v1147 = vand.u32 2147483647, %v1039
        %v1148 = vand.u32 2147483647, %v1041
        %v1149 = vand.u32 2147483647, %v1045
        %v1150 = vand.u32 2147483647, %v1047
        %v1151 = vand.u32 2147483647, %v1049
        %v1152 = vand.u32 2147483647, %v1051
        %v1153 = vand.u32 2147483647, %v1055
        %v1154 = vand.u32 2147483647, %v1057
        %v1155 = vand.u32 2147483647, %v1059
        %v1156 = vand.u32 2147483647, %v1061
        %v1157 = vand.u32 2147483647, %v1065
        %v1158 = vand.u32 2147483647, %v1067
        %v1159 = vand.u32 2147483647, %v1069
        %v1160 = vand.u32 2147483647, %v1071
        %v1161 = vand.u32 2147483647, %v1075
        %v1162 = vand.u32 2147483647, %v1077
        %v1163 = vand.u32 2147483647, %v1079
        %v1164 = vand.u32 2147483647, %v1081
        %v1165 = vand.u32 2147483647, %v1085
        %v1166 = vand.u32 2147483647, %v1087
        %v1167 = vand.u32 2147483647, %v1089
        %v1168 = vand.u32 2147483647, %v1091
        %v1169 = vand.u32 2147483647, %v1095
        %v1170 = vand.u32 2147483647, %v1097
        %v1171 = vand.u32 2147483647, %v1099
        %v1172 = vand.u32 2147483647, %v1101
        %v1173 = vand.u32 2147483647, %v1105
        %v1174 = vand.u32 2147483647, %v1107
        %v1175 = vand.u32 2147483647, %v1109
        %v1176 = vand.u32 2147483647, %v1111
        %v1177 = vsub.f32 0.0, %v1113
        %v1178 = vsub.f32 0.0, %v1114
        %v1179 = vsub.f32 0.0, %v1115
        %v1180 = vsub.f32 0.0, %v1116
        %v1181 = vsub.f32 0.0, %v1117
        %v1182 = vsub.f32 0.0, %v1118
        %v1183 = vsub.f32 0.0, %v1119
        %v1184 = vsub.f32 0.0, %v1120
        %v1185 = vsub.f32 0.0, %v1121
        %v1186 = vsub.f32 0.0, %v1122
        %v1187 = vsub.f32 0.0, %v1123
        %v1188 = vsub.f32 0.0, %v1124
        %v1189 = vsub.f32 0.0, %v1125
        %v1190 = vsub.f32 0.0, %v1126
        %v1191 = vsub.f32 0.0, %v1127
        %v1192 = vsub.f32 0.0, %v1128
        %v1193 = vsub.f32 0.0, %v1129
        %v1194 = vsub.f32 0.0, %v1130
        %v1195 = vsub.f32 0.0, %v1131
        %v1196 = vsub.f32 0.0, %v1132
        %v1197 = vsub.f32 0.0, %v1133
        %v1198 = vsub.f32 0.0, %v1134
        %v1199 = vsub.f32 0.0, %v1135
        %v1200 = vsub.f32 0.0, %v1136
        %v1201 = vsub.f32 0.0, %v1137
        %v1202 = vsub.f32 0.0, %v1138
        %v1203 = vsub.f32 0.0, %v1139
        %v1204 = vsub.f32 0.0, %v1140
        %v1205 = vsub.f32 0.0, %v1141
        %v1206 = vsub.f32 0.0, %v1142
        %v1207 = vsub.f32 0.0, %v1143
        %v1208 = vsub.f32 0.0, %v1144
        %v1209 = vsub.f32 0.0, %v1145
        %v1210 = vsub.f32 0.0, %v1146
        %v1211 = vsub.f32 0.0, %v1147
        %v1212 = vsub.f32 0.0, %v1148
        %v1213 = vsub.f32 0.0, %v1149
        %v1214 = vsub.f32 0.0, %v1150
        %v1215 = vsub.f32 0.0, %v1151
        %v1216 = vsub.f32 0.0, %v1152
        %v1217 = vsub.f32 0.0, %v1153
        %v1218 = vsub.f32 0.0, %v1154
        %v1219 = vsub.f32 0.0, %v1155
        %v1220 = vsub.f32 0.0, %v1156
        %v1221 = vsub.f32 0.0, %v1157
        %v1222 = vsub.f32 0.0, %v1158
        %v1223 = vsub.f32 0.0, %v1159
        %v1224 = vsub.f32 0.0, %v1160
        %v1225 = vsub.f32 0.0, %v1161
        %v1226 = vsub.f32 0.0, %v1162
        %v1227 = vsub.f32 0.0, %v1163
        %v1228 = vsub.f32 0.0, %v1164
        %v1229 = vsub.f32 0.0, %v1165
        %v1230 = vsub.f32 0.0, %v1166
        %v1231 = vsub.f32 0.0, %v1167
        %v1232 = vsub.f32 0.0, %v1168
        %v1233 = vsub.f32 0.0, %v1169
        %v1234 = vsub.f32 0.0, %v1170
        %v1235 = vsub.f32 0.0, %v1171
        %v1236 = vsub.f32 0.0, %v1172
        %v1237 = vsub.f32 0.0, %v1173
        %v1238 = vsub.f32 0.0, %v1174
        %v1239 = vsub.f32 0.0, %v1175
        %v1240 = vsub.f32 0.0, %v1176
        %v1241 = vmul.f32 %v1177, 1.442695
        %v1242 = vpow.pop %v1241
        %v1243 = vmul.f32 %v1178, 1.442695
        %v1244 = vpow.pop %v1243
        %v1245 = vmul.f32 %v1179, 1.442695
        %v1246 = vpow.pop %v1245
        %v1247 = vmul.f32 %v1180, 1.442695
        %v1248 = vpow.pop %v1247
        %v1249 = vmul.f32 %v1181, 1.442695
        %v1250 = vpow.pop %v1249
        %v1251 = vmul.f32 %v1182, 1.442695
        %v1252 = vpow.pop %v1251
        %v1253 = vmul.f32 %v1183, 1.442695
        %v1254 = vpow.pop %v1253
        %v1255 = vmul.f32 %v1184, 1.442695
        %v1256 = vpow.pop %v1255
        %v1257 = vmul.f32 %v1185, 1.442695
        %v1258 = vpow.pop %v1257
        %v1259 = vmul.f32 %v1186, 1.442695
        %v1260 = vpow.pop %v1259
        %v1261 = vmul.f32 %v1187, 1.442695
        %v1262 = vpow.pop %v1261
        %v1263 = vmul.f32 %v1188, 1.442695
        %v1264 = vpow.pop %v1263
        %v1265 = vmul.f32 %v1189, 1.442695
        %v1266 = vpow.pop %v1265
        %v1267 = vmul.f32 %v1190, 1.442695
        %v1268 = vpow.pop %v1267
        %v1269 = vmul.f32 %v1191, 1.442695
        %v1270 = vpow.pop %v1269
        %v1271 = vmul.f32 %v1192, 1.442695
        %v1272 = vpow.pop %v1271
        %v1273 = vmul.f32 %v1193, 1.442695
        %v1274 = vpow.pop %v1273
        %v1275 = vmul.f32 %v1194, 1.442695
        %v1276 = vpow.pop %v1275
        %v1277 = vmul.f32 %v1195, 1.442695
        %v1278 = vpow.pop %v1277
        %v1279 = vmul.f32 %v1196, 1.442695
        %v1280 = vpow.pop %v1279
        %v1281 = vmul.f32 %v1197, 1.442695
        %v1282 = vpow.pop %v1281
        %v1283 = vmul.f32 %v1198, 1.442695
        %v1284 = vpow.pop %v1283
        %v1285 = vmul.f32 %v1199, 1.442695
        %v1286 = vpow.pop %v1285
        %v1287 = vmul.f32 %v1200, 1.442695
        %v1288 = vpow.pop %v1287
        %v1289 = vmul.f32 %v1201, 1.442695
        %v1290 = vpow.pop %v1289
        %v1291 = vmul.f32 %v1202, 1.442695
        %v1292 = vpow.pop %v1291
        %v1293 = vmul.f32 %v1203, 1.442695
        %v1294 = vpow.pop %v1293
        %v1295 = vmul.f32 %v1204, 1.442695
        %v1296 = vpow.pop %v1295
        %v1297 = vmul.f32 %v1205, 1.442695
        %v1298 = vpow.pop %v1297
        %v1299 = vmul.f32 %v1206, 1.442695
        %v1300 = vpow.pop %v1299
        %v1301 = vmul.f32 %v1207, 1.442695
        %v1302 = vpow.pop %v1301
        %v1303 = vmul.f32 %v1208, 1.442695
        %v1304 = vpow.pop %v1303
        %v1305 = vmul.f32 %v1209, 1.442695
        %v1306 = vpow.pop %v1305
        %v1307 = vmul.f32 %v1210, 1.442695
        %v1308 = vpow.pop %v1307
        %v1309 = vmul.f32 %v1211, 1.442695
        %v1310 = vpow.pop %v1309
        %v1311 = vmul.f32 %v1212, 1.442695
        %v1312 = vpow.pop %v1311
        %v1313 = vmul.f32 %v1213, 1.442695
        %v1314 = vpow.pop %v1313
        %v1315 = vmul.f32 %v1214, 1.442695
        %v1316 = vpow.pop %v1315
        %v1317 = vmul.f32 %v1215, 1.442695
        %v1318 = vpow.pop %v1317
        %v1319 = vmul.f32 %v1216, 1.442695
        %v1320 = vpow.pop %v1319
        %v1321 = vmul.f32 %v1217, 1.442695
        %v1322 = vpow.pop %v1321
        %v1323 = vmul.f32 %v1218, 1.442695
        %v1324 = vpow.pop %v1323
        %v1325 = vmul.f32 %v1219, 1.442695
        %v1326 = vpow.pop %v1325
        %v1327 = vmul.f32 %v1220, 1.442695
        %v1328 = vpow.pop %v1327
        %v1329 = vmul.f32 %v1221, 1.442695
        %v1330 = vpow.pop %v1329
        %v1331 = vmul.f32 %v1222, 1.442695
        %v1332 = vpow.pop %v1331
        %v1333 = vmul.f32 %v1223, 1.442695
        %v1334 = vpow.pop %v1333
        %v1335 = vmul.f32 %v1224, 1.442695
        %v1336 = vpow.pop %v1335
        %v1337 = vmul.f32 %v1225, 1.442695
        %v1338 = vpow.pop %v1337
        %v1339 = vmul.f32 %v1226, 1.442695
        %v1340 = vpow.pop %v1339
        %v1341 = vmul.f32 %v1227, 1.442695
        %v1342 = vpow.pop %v1341
        %v1343 = vmul.f32 %v1228, 1.442695
        %v1344 = vpow.pop %v1343
        %v1345 = vmul.f32 %v1229, 1.442695
        %v1346 = vpow.pop %v1345
        %v1347 = vmul.f32 %v1230, 1.442695
        %v1348 = vpow.pop %v1347
        %v1349 = vmul.f32 %v1231, 1.442695
        %v1350 = vpow.pop %v1349
        %v1351 = vmul.f32 %v1232, 1.442695
        %v1352 = vpow.pop %v1351
        %v1353 = vmul.f32 %v1233, 1.442695
        %v1354 = vpow.pop %v1353
        %v1355 = vmul.f32 %v1234, 1.442695
        %v1356 = vpow.pop %v1355
        %v1357 = vmul.f32 %v1235, 1.442695
        %v1358 = vpow.pop %v1357
        %v1359 = vmul.f32 %v1236, 1.442695
        %v1360 = vpow.pop %v1359
        %v1361 = vmul.f32 %v1237, 1.442695
        %v1362 = vpow.pop %v1361
        %v1363 = vmul.f32 %v1238, 1.442695
        %v1364 = vpow.pop %v1363
        %v1365 = vmul.f32 %v1239, 1.442695
        %v1366 = vpow.pop %v1365
        %v1367 = vmul.f32 %v1240, 1.442695
        %v1368 = vpow.pop %v1367
        %v1369 = vadd.f32 %v1242, 1.0
        %v1370 = vadd.f32 %v1244, 1.0
        %v1371 = vadd.f32 %v1246, 1.0
        %v1372 = vadd.f32 %v1248, 1.0
        %v1373 = vadd.f32 %v1250, 1.0
        %v1374 = vadd.f32 %v1252, 1.0
        %v1375 = vadd.f32 %v1254, 1.0
        %v1376 = vadd.f32 %v1256, 1.0
        %v1377 = vadd.f32 %v1258, 1.0
        %v1378 = vadd.f32 %v1260, 1.0
        %v1379 = vadd.f32 %v1262, 1.0
        %v1380 = vadd.f32 %v1264, 1.0
        %v1381 = vadd.f32 %v1266, 1.0
        %v1382 = vadd.f32 %v1268, 1.0
        %v1383 = vadd.f32 %v1270, 1.0
        %v1384 = vadd.f32 %v1272, 1.0
        %v1385 = vadd.f32 %v1274, 1.0
        %v1386 = vadd.f32 %v1276, 1.0
        %v1387 = vadd.f32 %v1278, 1.0
        %v1388 = vadd.f32 %v1280, 1.0
        %v1389 = vadd.f32 %v1282, 1.0
        %v1390 = vadd.f32 %v1284, 1.0
        %v1391 = vadd.f32 %v1286, 1.0
        %v1392 = vadd.f32 %v1288, 1.0
        %v1393 = vadd.f32 %v1290, 1.0
        %v1394 = vadd.f32 %v1292, 1.0
        %v1395 = vadd.f32 %v1294, 1.0
        %v1396 = vadd.f32 %v1296, 1.0
        %v1397 = vadd.f32 %v1298, 1.0
        %v1398 = vadd.f32 %v1300, 1.0
        %v1399 = vadd.f32 %v1302, 1.0
        %v1400 = vadd.f32 %v1304, 1.0
        %v1401 = vadd.f32 %v1306, 1.0
        %v1402 = vadd.f32 %v1308, 1.0
        %v1403 = vadd.f32 %v1310, 1.0
        %v1404 = vadd.f32 %v1312, 1.0
        %v1405 = vadd.f32 %v1314, 1.0
        %v1406 = vadd.f32 %v1316, 1.0
        %v1407 = vadd.f32 %v1318, 1.0
        %v1408 = vadd.f32 %v1320, 1.0
        %v1409 = vadd.f32 %v1322, 1.0
        %v1410 = vadd.f32 %v1324, 1.0
        %v1411 = vadd.f32 %v1326, 1.0
        %v1412 = vadd.f32 %v1328, 1.0
        %v1413 = vadd.f32 %v1330, 1.0
        %v1414 = vadd.f32 %v1332, 1.0
        %v1415 = vadd.f32 %v1334, 1.0
        %v1416 = vadd.f32 %v1336, 1.0
        %v1417 = vadd.f32 %v1338, 1.0
        %v1418 = vadd.f32 %v1340, 1.0
        %v1419 = vadd.f32 %v1342, 1.0
        %v1420 = vadd.f32 %v1344, 1.0
        %v1421 = vadd.f32 %v1346, 1.0
        %v1422 = vadd.f32 %v1348, 1.0
        %v1423 = vadd.f32 %v1350, 1.0
        %v1424 = vadd.f32 %v1352, 1.0
        %v1425 = vadd.f32 %v1354, 1.0
        %v1426 = vadd.f32 %v1356, 1.0
        %v1427 = vadd.f32 %v1358, 1.0
        %v1428 = vadd.f32 %v1360, 1.0
        %v1429 = vadd.f32 %v1362, 1.0
        %v1430 = vadd.f32 %v1364, 1.0
        %v1431 = vadd.f32 %v1366, 1.0
        %v1432 = vadd.f32 %v1368, 1.0
        %v1433 = vrcp.pop %v1369
        %v1434 = vrcp.pop %v1370
        %v1435 = vrcp.pop %v1371
        %v1436 = vrcp.pop %v1372
        %v1437 = vrcp.pop %v1373
        %v1438 = vrcp.pop %v1374
        %v1439 = vrcp.pop %v1375
        %v1440 = vrcp.pop %v1376
        %v1441 = vrcp.pop %v1377
        %v1442 = vrcp.pop %v1378
        %v1443 = vrcp.pop %v1379
        %v1444 = vrcp.pop %v1380
        %v1445 = vrcp.pop %v1381
        %v1446 = vrcp.pop %v1382
        %v1447 = vrcp.pop %v1383
        %v1448 = vrcp.pop %v1384
        %v1449 = vrcp.pop %v1385
        %v1450 = vrcp.pop %v1386
        %v1451 = vrcp.pop %v1387
        %v1452 = vrcp.pop %v1388
        %v1453 = vrcp.pop %v1389
        %v1454 = vrcp.pop %v1390
        %v1455 = vrcp.pop %v1391
        %v1456 = vrcp.pop %v1392
        %v1457 = vrcp.pop %v1393
        %v1458 = vrcp.pop %v1394
        %v1459 = vrcp.pop %v1395
        %v1460 = vrcp.pop %v1396
        %v1461 = vrcp.pop %v1397
        %v1462 = vrcp.pop %v1398
        %v1463 = vrcp.pop %v1399
        %v1464 = vrcp.pop %v1400
        %v1465 = vrcp.pop %v1401
        %v1466 = vrcp.pop %v1402
        %v1467 = vrcp.pop %v1403
        %v1468 = vrcp.pop %v1404
        %v1469 = vrcp.pop %v1405
        %v1470 = vrcp.pop %v1406
        %v1471 = vrcp.pop %v1407
        %v1472 = vrcp.pop %v1408
        %v1473 = vrcp.pop %v1409
        %v1474 = vrcp.pop %v1410
        %v1475 = vrcp.pop %v1411
        %v1476 = vrcp.pop %v1412
        %v1477 = vrcp.pop %v1413
        %v1478 = vrcp.pop %v1414
        %v1479 = vrcp.pop %v1415
        %v1480 = vrcp.pop %v1416
        %v1481 = vrcp.pop %v1417
        %v1482 = vrcp.pop %v1418
        %v1483 = vrcp.pop %v1419
        %v1484 = vrcp.pop %v1420
        %v1485 = vrcp.pop %v1421
        %v1486 = vrcp.pop %v1422
        %v1487 = vrcp.pop %v1423
        %v1488 = vrcp.pop %v1424
        %v1489 = vrcp.pop %v1425
        %v1490 = vrcp.pop %v1426
        %v1491 = vrcp.pop %v1427
        %v1492 = vrcp.pop %v1428
        %v1493 = vrcp.pop %v1429
        %v1494 = vrcp.pop %v1430
        %v1495 = vrcp.pop %v1431
        %v1496 = vrcp.pop %v1432
        %vm1497 = vcmp.ge.f32.partialorder %v955, 0.0
        %vm1498 = vcmp.ge.f32.partialorder %v957, 0.0
        %vm1499 = vcmp.ge.f32.partialorder %v959, 0.0
        %vm1500 = vcmp.ge.f32.partialorder %v961, 0.0
        %vm1501 = vcmp.ge.f32.partialorder %v965, 0.0
        %vm1502 = vcmp.ge.f32.partialorder %v967, 0.0
        %vm1503 = vcmp.ge.f32.partialorder %v969, 0.0
        %vm1504 = vcmp.ge.f32.partialorder %v971, 0.0
        %vm1505 = vcmp.ge.f32.partialorder %v975, 0.0
        %vm1506 = vcmp.ge.f32.partialorder %v977, 0.0
        %vm1507 = vcmp.ge.f32.partialorder %v979, 0.0
        %vm1508 = vcmp.ge.f32.partialorder %v981, 0.0
        %vm1509 = vcmp.ge.f32.partialorder %v985, 0.0
        %vm1510 = vcmp.ge.f32.partialorder %v987, 0.0
        %vm1511 = vcmp.ge.f32.partialorder %v989, 0.0
        %vm1512 = vcmp.ge.f32.partialorder %v991, 0.0
        %vm1513 = vcmp.ge.f32.partialorder %v995, 0.0
        %vm1514 = vcmp.ge.f32.partialorder %v997, 0.0
        %vm1515 = vcmp.ge.f32.partialorder %v999, 0.0
        %vm1516 = vcmp.ge.f32.partialorder %v1001, 0.0
        %vm1517 = vcmp.ge.f32.partialorder %v1005, 0.0
        %vm1518 = vcmp.ge.f32.partialorder %v1007, 0.0
        %vm1519 = vcmp.ge.f32.partialorder %v1009, 0.0
        %vm1520 = vcmp.ge.f32.partialorder %v1011, 0.0
        %vm1521 = vcmp.ge.f32.partialorder %v1015, 0.0
        %vm1522 = vcmp.ge.f32.partialorder %v1017, 0.0
        %vm1523 = vcmp.ge.f32.partialorder %v1019, 0.0
        %vm1524 = vcmp.ge.f32.partialorder %v1021, 0.0
        %vm1525 = vcmp.ge.f32.partialorder %v1025, 0.0
        %vm1526 = vcmp.ge.f32.partialorder %v1027, 0.0
        %vm1527 = vcmp.ge.f32.partialorder %v1029, 0.0
        %vm1528 = vcmp.ge.f32.partialorder %v1031, 0.0
        %vm1529 = vcmp.ge.f32.partialorder %v1035, 0.0
        %vm1530 = vcmp.ge.f32.partialorder %v1037, 0.0
        %vm1531 = vcmp.ge.f32.partialorder %v1039, 0.0
        %vm1532 = vcmp.ge.f32.partialorder %v1041, 0.0
        %vm1533 = vcmp.ge.f32.partialorder %v1045, 0.0
        %vm1534 = vcmp.ge.f32.partialorder %v1047, 0.0
        %vm1535 = vcmp.ge.f32.partialorder %v1049, 0.0
        %vm1536 = vcmp.ge.f32.partialorder %v1051, 0.0
        %vm1537 = vcmp.ge.f32.partialorder %v1055, 0.0
        %vm1538 = vcmp.ge.f32.partialorder %v1057, 0.0
        %vm1539 = vcmp.ge.f32.partialorder %v1059, 0.0
        %vm1540 = vcmp.ge.f32.partialorder %v1061, 0.0
        %vm1541 = vcmp.ge.f32.partialorder %v1065, 0.0
        %vm1542 = vcmp.ge.f32.partialorder %v1067, 0.0
        %vm1543 = vcmp.ge.f32.partialorder %v1069, 0.0
        %vm1544 = vcmp.ge.f32.partialorder %v1071, 0.0
        %vm1545 = vcmp.ge.f32.partialorder %v1075, 0.0
        %vm1546 = vcmp.ge.f32.partialorder %v1077, 0.0
        %vm1547 = vcmp.ge.f32.partialorder %v1079, 0.0
        %vm1548 = vcmp.ge.f32.partialorder %v1081, 0.0
        %vm1549 = vcmp.ge.f32.partialorder %v1085, 0.0
        %vm1550 = vcmp.ge.f32.partialorder %v1087, 0.0
        %vm1551 = vcmp.ge.f32.partialorder %v1089, 0.0
        %vm1552 = vcmp.ge.f32.partialorder %v1091, 0.0
        %vm1553 = vcmp.ge.f32.partialorder %v1095, 0.0
        %vm1554 = vcmp.ge.f32.partialorder %v1097, 0.0
        %vm1555 = vcmp.ge.f32.partialorder %v1099, 0.0
        %vm1556 = vcmp.ge.f32.partialorder %v1101, 0.0
        %vm1557 = vcmp.ge.f32.partialorder %v1105, 0.0
        %vm1558 = vcmp.ge.f32.partialorder %v1107, 0.0
        %vm1559 = vcmp.ge.f32.partialorder %v1109, 0.0
        %vm1560 = vcmp.ge.f32.partialorder %v1111, 0.0
        %v1561 = vmul.f32 %v1242, %v1433
        %v1562 = vmul.f32 %v1244, %v1434
        %v1563 = vmul.f32 %v1246, %v1435
        %v1564 = vmul.f32 %v1248, %v1436
        %v1565 = vmul.f32 %v1250, %v1437
        %v1566 = vmul.f32 %v1252, %v1438
        %v1567 = vmul.f32 %v1254, %v1439
        %v1568 = vmul.f32 %v1256, %v1440
        %v1569 = vmul.f32 %v1258, %v1441
        %v1570 = vmul.f32 %v1260, %v1442
        %v1571 = vmul.f32 %v1262, %v1443
        %v1572 = vmul.f32 %v1264, %v1444
        %v1573 = vmul.f32 %v1266, %v1445
        %v1574 = vmul.f32 %v1268, %v1446
        %v1575 = vmul.f32 %v1270, %v1447
        %v1576 = vmul.f32 %v1272, %v1448
        %v1577 = vmul.f32 %v1274, %v1449
        %v1578 = vmul.f32 %v1276, %v1450
        %v1579 = vmul.f32 %v1278, %v1451
        %v1580 = vmul.f32 %v1280, %v1452
        %v1581 = vmul.f32 %v1282, %v1453
        %v1582 = vmul.f32 %v1284, %v1454
        %v1583 = vmul.f32 %v1286, %v1455
        %v1584 = vmul.f32 %v1288, %v1456
        %v1585 = vmul.f32 %v1290, %v1457
        %v1586 = vmul.f32 %v1292, %v1458
        %v1587 = vmul.f32 %v1294, %v1459
        %v1588 = vmul.f32 %v1296, %v1460
        %v1589 = vmul.f32 %v1298, %v1461
        %v1590 = vmul.f32 %v1300, %v1462
        %v1591 = vmul.f32 %v1302, %v1463
        %v1592 = vmul.f32 %v1304, %v1464
        %v1593 = vmul.f32 %v1306, %v1465
        %v1594 = vmul.f32 %v1308, %v1466
        %v1595 = vmul.f32 %v1310, %v1467
        %v1596 = vmul.f32 %v1312, %v1468
        %v1597 = vmul.f32 %v1314, %v1469
        %v1598 = vmul.f32 %v1316, %v1470
        %v1599 = vmul.f32 %v1318, %v1471
        %v1600 = vmul.f32 %v1320, %v1472
        %v1601 = vmul.f32 %v1322, %v1473
        %v1602 = vmul.f32 %v1324, %v1474
        %v1603 = vmul.f32 %v1326, %v1475
        %v1604 = vmul.f32 %v1328, %v1476
        %v1605 = vmul.f32 %v1330, %v1477
        %v1606 = vmul.f32 %v1332, %v1478
        %v1607 = vmul.f32 %v1334, %v1479
        %v1608 = vmul.f32 %v1336, %v1480
        %v1609 = vmul.f32 %v1338, %v1481
        %v1610 = vmul.f32 %v1340, %v1482
        %v1611 = vmul.f32 %v1342, %v1483
        %v1612 = vmul.f32 %v1344, %v1484
        %v1613 = vmul.f32 %v1346, %v1485
        %v1614 = vmul.f32 %v1348, %v1486
        %v1615 = vmul.f32 %v1350, %v1487
        %v1616 = vmul.f32 %v1352, %v1488
        %v1617 = vmul.f32 %v1354, %v1489
        %v1618 = vmul.f32 %v1356, %v1490
        %v1619 = vmul.f32 %v1358, %v1491
        %v1620 = vmul.f32 %v1360, %v1492
        %v1621 = vmul.f32 %v1362, %v1493
        %v1622 = vmul.f32 %v1364, %v1494
        %v1623 = vmul.f32 %v1366, %v1495
        %v1624 = vmul.f32 %v1368, %v1496
        %v1625 = vsel %vm1497, %v1433, %v1561
        %v1626 = vsel %vm1498, %v1434, %v1562
        %v1627 = vsel %vm1499, %v1435, %v1563
        %v1628 = vsel %vm1500, %v1436, %v1564
        %v1629 = vsel %vm1501, %v1437, %v1565
        %v1630 = vsel %vm1502, %v1438, %v1566
        %v1631 = vsel %vm1503, %v1439, %v1567
        %v1632 = vsel %vm1504, %v1440, %v1568
        %v1633 = vsel %vm1505, %v1441, %v1569
        %v1634 = vsel %vm1506, %v1442, %v1570
        %v1635 = vsel %vm1507, %v1443, %v1571
        %v1636 = vsel %vm1508, %v1444, %v1572
        %v1637 = vsel %vm1509, %v1445, %v1573
        %v1638 = vsel %vm1510, %v1446, %v1574
        %v1639 = vsel %vm1511, %v1447, %v1575
        %v1640 = vsel %vm1512, %v1448, %v1576
        %v1641 = vsel %vm1513, %v1449, %v1577
        %v1642 = vsel %vm1514, %v1450, %v1578
        %v1643 = vsel %vm1515, %v1451, %v1579
        %v1644 = vsel %vm1516, %v1452, %v1580
        %v1645 = vsel %vm1517, %v1453, %v1581
        %v1646 = vsel %vm1518, %v1454, %v1582
        %v1647 = vsel %vm1519, %v1455, %v1583
        %v1648 = vsel %vm1520, %v1456, %v1584
        %v1649 = vsel %vm1521, %v1457, %v1585
        %v1650 = vsel %vm1522, %v1458, %v1586
        %v1651 = vsel %vm1523, %v1459, %v1587
        %v1652 = vsel %vm1524, %v1460, %v1588
        %v1653 = vsel %vm1525, %v1461, %v1589
        %v1654 = vsel %vm1526, %v1462, %v1590
        %v1655 = vsel %vm1527, %v1463, %v1591
        %v1656 = vsel %vm1528, %v1464, %v1592
        %v1657 = vsel %vm1529, %v1465, %v1593
        %v1658 = vsel %vm1530, %v1466, %v1594
        %v1659 = vsel %vm1531, %v1467, %v1595
        %v1660 = vsel %vm1532, %v1468, %v1596
        %v1661 = vsel %vm1533, %v1469, %v1597
        %v1662 = vsel %vm1534, %v1470, %v1598
        %v1663 = vsel %vm1535, %v1471, %v1599
        %v1664 = vsel %vm1536, %v1472, %v1600
        %v1665 = vsel %vm1537, %v1473, %v1601
        %v1666 = vsel %vm1538, %v1474, %v1602
        %v1667 = vsel %vm1539, %v1475, %v1603
        %v1668 = vsel %vm1540, %v1476, %v1604
        %v1669 = vsel %vm1541, %v1477, %v1605
        %v1670 = vsel %vm1542, %v1478, %v1606
        %v1671 = vsel %vm1543, %v1479, %v1607
        %v1672 = vsel %vm1544, %v1480, %v1608
        %v1673 = vsel %vm1545, %v1481, %v1609
        %v1674 = vsel %vm1546, %v1482, %v1610
        %v1675 = vsel %vm1547, %v1483, %v1611
        %v1676 = vsel %vm1548, %v1484, %v1612
        %v1677 = vsel %vm1549, %v1485, %v1613
        %v1678 = vsel %vm1550, %v1486, %v1614
        %v1679 = vsel %vm1551, %v1487, %v1615
        %v1680 = vsel %vm1552, %v1488, %v1616
        %v1681 = vsel %vm1553, %v1489, %v1617
        %v1682 = vsel %vm1554, %v1490, %v1618
        %v1683 = vsel %vm1555, %v1491, %v1619
        %v1684 = vsel %vm1556, %v1492, %v1620
        %v1685 = vsel %vm1557, %v1493, %v1621
        %v1686 = vsel %vm1558, %v1494, %v1622
        %v1687 = vsel %vm1559, %v1495, %v1623
        %v1688 = vsel %vm1560, %v1496, %v1624
        %1689 = vst [vmem:[%s272] sm:$0xff] %v1625
        %1690 = vst [vmem:[%s272 + $0x8] sm:$0xff] %v1626
        %1691 = vst [vmem:[%s272 + $0x10] sm:$0xff] %v1627
        %1692 = vst [vmem:[%s272 + $0x18] sm:$0xff] %v1628
        %1693 = vst [vmem:[%s272 + $0x20] sm:$0xff] %v1629
        %1694 = vst [vmem:[%s272 + $0x28] sm:$0xff] %v1630
        %1695 = vst [vmem:[%s272 + $0x30] sm:$0xff] %v1631
        %1696 = vst [vmem:[%s272 + $0x38] sm:$0xff] %v1632
        %1697 = vst [vmem:[%s272 + $0x40] sm:$0xff] %v1633
        %1698 = vst [vmem:[%s272 + $0x48] sm:$0xff] %v1634
        %1699 = vst [vmem:[%s272 + $0x50] sm:$0xff] %v1635
        %1700 = vst [vmem:[%s272 + $0x58] sm:$0xff] %v1636
        %1701 = vst [vmem:[%s272 + $0x60] sm:$0xff] %v1637
        %1702 = vst [vmem:[%s272 + $0x68] sm:$0xff] %v1638
        %1703 = vst [vmem:[%s272 + $0x70] sm:$0xff] %v1639
        %1704 = vst [vmem:[%s272 + $0x78] sm:$0xff] %v1640
        %1705 = vst [vmem:[%s272 + $0x80] sm:$0xff] %v1641
        %1706 = vst [vmem:[%s272 + $0x88] sm:$0xff] %v1642
        %1707 = vst [vmem:[%s272 + $0x90] sm:$0xff] %v1643
        %1708 = vst [vmem:[%s272 + $0x98] sm:$0xff] %v1644
        %1709 = vst [vmem:[%s272 + $0xa0] sm:$0xff] %v1645
        %1710 = vst [vmem:[%s272 + $0xa8] sm:$0xff] %v1646
        %1711 = vst [vmem:[%s272 + $0xb0] sm:$0xff] %v1647
        %1712 = vst [vmem:[%s272 + $0xb8] sm:$0xff] %v1648
        %1713 = vst [vmem:[%s272 + $0xc0] sm:$0xff] %v1649
        %1714 = vst [vmem:[%s272 + $0xc8] sm:$0xff] %v1650
        %1715 = vst [vmem:[%s272 + $0xd0] sm:$0xff] %v1651
        %1716 = vst [vmem:[%s272 + $0xd8] sm:$0xff] %v1652
        %1717 = vst [vmem:[%s272 + $0xe0] sm:$0xff] %v1653
        %1718 = vst [vmem:[%s272 + $0xe8] sm:$0xff] %v1654
        %1719 = vst [vmem:[%s272 + $0xf0] sm:$0xff] %v1655
        %1720 = vst [vmem:[%s272 + $0xf8] sm:$0xff] %v1656
        %1721 = vst [vmem:[%s272 + $0x100] sm:$0xff] %v1657
        %1722 = vst [vmem:[%s272 + $0x108] sm:$0xff] %v1658
        %1723 = vst [vmem:[%s272 + $0x110] sm:$0xff] %v1659
        %1724 = vst [vmem:[%s272 + $0x118] sm:$0xff] %v1660
        %1725 = vst [vmem:[%s272 + $0x120] sm:$0xff] %v1661
        %1726 = vst [vmem:[%s272 + $0x128] sm:$0xff] %v1662
        %1727 = vst [vmem:[%s272 + $0x130] sm:$0xff] %v1663
        %1728 = vst [vmem:[%s272 + $0x138] sm:$0xff] %v1664
        %1729 = vst [vmem:[%s272 + $0x140] sm:$0xff] %v1665
        %1730 = vst [vmem:[%s272 + $0x148] sm:$0xff] %v1666
        %1731 = vst [vmem:[%s272 + $0x150] sm:$0xff] %v1667
        %1732 = vst [vmem:[%s272 + $0x158] sm:$0xff] %v1668
        %1733 = vst [vmem:[%s272 + $0x160] sm:$0xff] %v1669
        %1734 = vst [vmem:[%s272 + $0x168] sm:$0xff] %v1670
        %1735 = vst [vmem:[%s272 + $0x170] sm:$0xff] %v1671
        %1736 = vst [vmem:[%s272 + $0x178] sm:$0xff] %v1672
        %1737 = vst [vmem:[%s272 + $0x180] sm:$0xff] %v1673
        %1738 = vst [vmem:[%s272 + $0x188] sm:$0xff] %v1674
        %1739 = vst [vmem:[%s272 + $0x190] sm:$0xff] %v1675
        %1740 = vst [vmem:[%s272 + $0x198] sm:$0xff] %v1676
        %1741 = vst [vmem:[%s272 + $0x1a0] sm:$0xff] %v1677
        %1742 = vst [vmem:[%s272 + $0x1a8] sm:$0xff] %v1678
        %1743 = vst [vmem:[%s272 + $0x1b0] sm:$0xff] %v1679
        %1744 = vst [vmem:[%s272 + $0x1b8] sm:$0xff] %v1680
        %1745 = vst [vmem:[%s272 + $0x1c0] sm:$0xff] %v1681
        %1746 = vst [vmem:[%s272 + $0x1c8] sm:$0xff] %v1682
        %1747 = vst [vmem:[%s272 + $0x1d0] sm:$0xff] %v1683
        %1748 = vst [vmem:[%s272 + $0x1d8] sm:$0xff] %v1684
        %1749 = vst [vmem:[%s272 + $0x1e0] sm:$0xff] %v1685
        %1750 = vst [vmem:[%s272 + $0x1e8] sm:$0xff] %v1686
        %1751 = vst [vmem:[%s272 + $0x1f0] sm:$0xff] %v1687
        %1752 = vst [vmem:[%s272 + $0x1f8] sm:$0xff] %v1688
        %s1753 = sand.u32 %s141, 1
        %s1754 = scalar_lea.sflag [#allocation4], %s1753
        %s1755 = sand.u32 %s141, 1
        %s1756 = smul.addr %s1755, 512
        %s1757 = scalar_lea.vmem [#allocation8], %s1756
        // Predicated region
        $region53: #{tpu_custom_call.1} parent=39 // pred_check
          %p1758 = pneg %p151
        $region54: #{tpu_custom_call.1} parent=39 // pred_check_branch
          %1760 = sbr.rel (%p1758) target = $region56
        $region55: #{tpu_custom_call.1} parent=39 // pred_region
          %s1761 = smul.u32 32, %s23
          %s1763 = ssub.s32 8192, 8192
          %1764 = vsyncadd %s1754, %s1763
          %s1765 = smul.addr %s1761, 2
          %s1766 = smul.addr %s1765, 128
          %s1767 = scalar_lea.hbm %s5, %s1766
          %s1768 = sshll.u32 %s1757, 4
          %s1769 = int_to_ptr.vmem [resolvable:$true] %s1768
          %1774 = dma.vmem_to_hbm [thread:$0]  %s1769, 8192, %s1767, %s1754, 256, 256, 16
        $region56: #{tpu_custom_call.1} parent=39 // pred_fallthru
          _
      $region40: #{tpu_custom_call.1} parent=5 // pred_fallthru
        _
      %p1775 = scmp.le.s32.totalorder 2, %s18
      // Predicated region
      $region57: #{tpu_custom_call.1} parent=5 // pred_check
        %p1776 = pneg %p1775
      $region58: #{tpu_custom_call.1} parent=5 // pred_check_branch
        %1778 = sbr.rel (%p1776) target = $region60
      $region59: #{tpu_custom_call.1} parent=5 // pred_region
        %s1779 = ssub.s32 %s18, 2
        // Predicated region
        $region61: #{tpu_custom_call.1} parent=59 // pred_check
          %p1780 = pneg %p157
        $region62: #{tpu_custom_call.1} parent=59 // pred_check_branch
          %1782 = sbr.rel (%p1780) target = $region64
        $region63: #{tpu_custom_call.1} parent=59 // pred_region
          %s1783 = sand.u32 %s142, 1
          %s1784 = scalar_lea.sflag [#allocation4], %s1783
          %s1785 = sand.u32 %s142, 1
          %s1786 = smul.addr %s1785, 512
          %s1787 = scalar_lea.vmem [#allocation8], %s1786
          %1788 = dma.done %s1784, 8192
        $region64: #{tpu_custom_call.1} parent=59 // pred_fallthru
          _
      $region60: #{tpu_custom_call.1} parent=5 // pred_fallthru
        _
    $region6: #{tpu_custom_call.1} parent=1 // loop_footer
      %s22 = sadd.s32 1, %s18
    $region7: #{tpu_custom_call.1} parent=1 // loop_footer_branch
      %17 = sbr.rel target = $region3
    $region8: #{tpu_custom_call.1} parent=1 // loop_exit
      _
    %1789 = vsyncpa [#allocation3], 1
    %s1790 = scalar_lea.sflag [#allocation3], 1
    %1791 = vsyncpa %s1790, 1
    %1792 = vsyncpa [#allocation6], 1
    %1793 = vsyncpa [#allocation4], 1
    %s1794 = scalar_lea.sflag [#allocation4], 1
    %1795 = vsyncpa %s1794, 1

</llo_original>
